<compile_context>
chip_gen: v7x
topology: tpu7x:2x2x1
jax: 0.10.0
libtpu: 0.0.40
codegen_flags: <defaults>
</compile_context>

<pallas_src>
import functools
import math

import jax
import jax.numpy as jnp
from jax import lax
from jax.experimental import pallas as pl
from jax.experimental.pallas import tpu as pltpu  # noqa: F401  (compiler params / scratch for the scaled variant)


# ---- small, forward-consistent problem sizes (module requires D % H == 0) ---
BATCH = 2
SEQ = 8                   # multiple of 8 -> clean sublane tiling
DIM = 128                 # input_dim; multiple of 128 -> lane-dense I/O
NUM_HEADS = 4
HEAD_DIM = DIM // NUM_HEADS

# bf16 operands are profitable on ALL generations (v5e MXU is also full-rate
# bf16); accumulation and softmax stay f32 regardless.  f32 default keeps exact
# module numerics at this toy size.
COMPUTE_DTYPE = jnp.float32


def mha_kernel(q_ref, k_ref, v_ref,
               wq_ref, bq_ref, wk_ref, bk_ref, wv_ref, bv_ref,
               wo_ref, bo_ref,
               o_ref, *, batch, seq, num_heads, head_dim):
    cd = COMPUTE_DTYPE
    f32 = jnp.float32
    dim = num_heads * head_dim

    xq = q_ref[...].astype(cd)                      # (B*S, D)
    xk = k_ref[...].astype(cd)
    xv = v_ref[...].astype(cd)

    # --- projections: one (B*S, D) x (D, D) MXU GEMM each, f32 accumulate ---
    # (The three projections have distinct LHS operands, so no (D, 3D) fusion.)
    # 1/sqrt(head_dim) is already folded into wq/bq host-side -> no scale mul.
    q = jnp.dot(xq, wq_ref[...].astype(cd), preferred_element_type=f32) + bq_ref[...]
    k = jnp.dot(xk, wk_ref[...].astype(cd), preferred_element_type=f32) + bk_ref[...]
    v = jnp.dot(xv, wv_ref[...].astype(cd), preferred_element_type=f32) + bv_ref[...]

    # Leading-dim split only (lane layout unchanged, effectively free).
    qb = q.reshape(batch, seq, dim)
    kb = k.reshape(batch, seq, dim)
    vb = v.reshape(batch, seq, dim)

    # Lane index, built once (hoisted out of the head loop).
    lane = lax.broadcasted_iota(jnp.int32, (1, 1, dim), 2)

    # --- per-head attention via lane-masked contractions ---------------------
    # Head h lives in lanes [h*Dh, (h+1)*Dh).  Masking K/V to those lanes makes
    # the full-D contraction equal to the per-head Dh contraction, and each
    # head's context lands only in its own lanes, so summing over heads IS the
    # head merge.  No slicing / stacking / transposing of the lane dim at all.
    ctx = jnp.zeros((batch, seq, dim), f32)
    for h in range(num_heads):                       # static unroll (4 iters)
        in_head = (lane >= h * head_dim) & (lane < (h + 1) * head_dim)
        k_h = jnp.where(in_head, kb, 0.0)
        v_h = jnp.where(in_head, vb, 0.0)

        # (B, S, S) scores; batched 3-D einsum, single leading batch dim.
        s_h = jnp.einsum('bqd,bkd->bqk', qb.astype(cd), k_h.astype(cd),
                         preferred_element_type=f32)

        # Numerically-stable softmax over keys; exact f32 divide for parity
        # with the PyTorch module (kernel is not VALU-bound at this size).
        m = jnp.max(s_h, axis=-1, keepdims=True)
        p = jnp.exp(s_h - m)
        denom = jnp.sum(p, axis=-1, keepdims=True)
        attn = p / denom

        ctx = ctx + jnp.einsum('bqk,bkd->bqd', attn.astype(cd), v_h.astype(cd),
                               preferred_element_type=f32)

    # --- output projection (heads already merged in-place in the lane dim) ---
    merged = ctx.reshape(batch * seq, dim)
    out = jnp.dot(merged.astype(cd), wo_ref[...].astype(cd),
                  preferred_element_type=f32) + bo_ref[...]
    o_ref[...] = out.astype(o_ref.dtype)


@jax.jit
def multi_head_attention(query, key, value, kparams):
    """query/key/value: (B, S, D) float32.  kparams: kernel-prepped weights."""
    B, S, D = query.shape
    kernel = functools.partial(mha_kernel, batch=B, seq=S,
                               num_heads=NUM_HEADS, head_dim=D // NUM_HEADS)

    # No grid: the whole problem (B*S = 16 rows, D = 128 lanes) fits in VMEM as
    # whole-array blocks, so a single invocation avoids per-grid-step
    # DMA/sync/pipeline overhead that dominates at this size.  (At scale:
    # flash-style grid + "parallel" batch axis + pipelined weight tiles.)
    out_flat = pl.pallas_call(
        kernel,
        out_shape=jax.ShapeDtypeStruct((B * S, D), query.dtype),
    )(query.reshape(B * S, D), key.reshape(B * S, D), value.reshape(B * S, D),
      kparams["wq_t"], kparams["bq"],
      kparams["wk_t"], kparams["bk"],
      kparams["wv_t"], kparams["bv"],
      kparams["wo_t"], kparams["bo"])

    return out_flat.reshape(B, S, D)


def reference_mha(query, key, value, params):
    """Plain-JAX replica of the PyTorch forward (eval mode, mask built but unused)."""
    B, S, D = query.shape
    H, Dh = NUM_HEADS, HEAD_DIM
    Q = query @ params["wq_t"] + params["bq"][0]
    K = key @ params["wk_t"] + params["bk"][0]
    V = value @ params["wv_t"] + params["bv"][0]
    Q = Q.reshape(B, S, H, Dh).transpose(0, 2, 1, 3)
    K = K.reshape(B, S, H, Dh).transpose(0, 2, 1, 3)
    V = V.reshape(B, S, H, Dh).transpose(0, 2, 1, 3)
    energy = jnp.einsum("bhqd,bhkd->bhqk", Q, K) / jnp.sqrt(jnp.float32(Dh))
    attn = jax.nn.softmax(energy, axis=-1)
    x = jnp.einsum("bhqk,bhkd->bhqd", attn, V)
    x = x.transpose(0, 2, 1, 3).reshape(B, S, D)
    return x @ params["wo_t"] + params["bo"][0]


def init_params(key):
    """Raw nn.Linear-equivalent parameters (W^T stored as (D_in, D_out), bias (1, D))."""
    ks = jax.random.split(key, 8)

    def lin(kw, kb):
        w = jax.random.normal(kw, (DIM, DIM), jnp.float32) * 0.05
        b = jax.random.normal(kb, (1, DIM), jnp.float32) * 0.05
        return w.T, b

    wq_t, bq = lin(ks[0], ks[1])
    wk_t, bk = lin(ks[2], ks[3])
    wv_t, bv = lin(ks[4], ks[5])
    wo_t, bo = lin(ks[6], ks[7])
    return dict(wq_t=wq_t, bq=bq, wk_t=wk_t, bk=bk,
                wv_t=wv_t, bv=bv, wo_t=wo_t, bo=bo)


def prepare_kernel_params(params):
    """One-time host-side transform: fold 1/sqrt(head_dim) into the Q projection.

    Genuinely free (not a per-call wrapper op); removes the in-kernel scale
    multiply with no numerics change.  At scale, this is also where weights
    would be cast to bf16 for half the DMA bytes + native-rate MXU operands.
    """
    scale = 1.0 / math.sqrt(HEAD_DIM)
    kp = dict(params)
    kp["wq_t"] = params["wq_t"] * scale
    kp["bq"] = params["bq"] * scale
    return kp


if __name__ == "__main__":
    root = jax.random.PRNGKey(0)
    kp_key, kq, kk, kv = jax.random.split(root, 4)

    params = init_params(kp_key)
    kernel_params = prepare_kernel_params(params)   # host-side, once

    query = jax.random.normal(kq, (BATCH, SEQ, DIM), jnp.float32)
    key_in = jax.random.normal(kk, (BATCH, SEQ, DIM), jnp.float32)
    value = jax.random.normal(kv, (BATCH, SEQ, DIM), jnp.float32)

    out = multi_head_attention(query, key_in, value, kernel_params)
    out = jax.block_until_ready(out)

    ref = reference_mha(query, key_in, value, params)
    assert out.shape == (BATCH, SEQ, DIM)
    # All compute is exact f32 now (no approx reciprocal); remaining difference
    # is only f32 summation-order noise from the folded scale / MXU accumulate.
    max_err = jnp.max(jnp.abs(out - ref))
    assert jnp.allclose(out, ref, atol=1e-3, rtol=1e-3), (
        f"mismatch vs JAX reference (max abs err {max_err})")

    print("KERNEL_OK")
</pallas_src>

<mosaic_0001>
module attributes {stable_mosaic.version = 11 : i64} {
  func.func @mha_kernel(%arg0: memref<16x128xf32, #tpu.memory_space<vmem>>, %arg1: memref<16x128xf32, #tpu.memory_space<vmem>>, %arg2: memref<16x128xf32, #tpu.memory_space<vmem>>, %arg3: memref<128x128xf32, #tpu.memory_space<vmem>>, %arg4: memref<1x128xf32, #tpu.memory_space<vmem>>, %arg5: memref<128x128xf32, #tpu.memory_space<vmem>>, %arg6: memref<1x128xf32, #tpu.memory_space<vmem>>, %arg7: memref<128x128xf32, #tpu.memory_space<vmem>>, %arg8: memref<1x128xf32, #tpu.memory_space<vmem>>, %arg9: memref<128x128xf32, #tpu.memory_space<vmem>>, %arg10: memref<1x128xf32, #tpu.memory_space<vmem>>, %arg11: memref<16x128xf32, #tpu.memory_space<vmem>>) attributes {dimension_semantics = [], scalar_prefetch = 0 : i64, scratch_operands = 0 : i64, tpu.core_type = #tpu.core_type<tc>} {
    %c0 = arith.constant 0 : index
    %c0_0 = arith.constant 0 : index
    %0 = vector.load %arg0[%c0, %c0_0] : memref<16x128xf32, #tpu.memory_space<vmem>>, vector<16x128xf32>
    %c0_1 = arith.constant 0 : index
    %c0_2 = arith.constant 0 : index
    %1 = vector.load %arg1[%c0_1, %c0_2] : memref<16x128xf32, #tpu.memory_space<vmem>>, vector<16x128xf32>
    %c0_3 = arith.constant 0 : index
    %c0_4 = arith.constant 0 : index
    %2 = vector.load %arg2[%c0_3, %c0_4] : memref<16x128xf32, #tpu.memory_space<vmem>>, vector<16x128xf32>
    %c0_5 = arith.constant 0 : index
    %c0_6 = arith.constant 0 : index
    %3 = vector.load %arg3[%c0_5, %c0_6] : memref<128x128xf32, #tpu.memory_space<vmem>>, vector<128x128xf32>
    %cst = arith.constant dense<0.000000e+00> : vector<16x128xf32>
    %4 = tpu.matmul %0, %3, %cst {dimension_numbers = #tpu.dot_dimension_numbers<[1], [0], [0], [1], [0, 0, 1, 1], [], []>} : vector<16x128xf32>, vector<128x128xf32>, vector<16x128xf32> -> vector<16x128xf32>
    %c0_7 = arith.constant 0 : index
    %c0_8 = arith.constant 0 : index
    %5 = vector.load %arg4[%c0_7, %c0_8] : memref<1x128xf32, #tpu.memory_space<vmem>>, vector<1x128xf32>
    %6 = vector.broadcast %5 : vector<1x128xf32> to vector<16x128xf32>
    %7 = arith.addf %4, %6 : vector<16x128xf32>
    %c0_9 = arith.constant 0 : index
    %c0_10 = arith.constant 0 : index
    %8 = vector.load %arg5[%c0_9, %c0_10] : memref<128x128xf32, #tpu.memory_space<vmem>>, vector<128x128xf32>
    %cst_11 = arith.constant dense<0.000000e+00> : vector<16x128xf32>
    %9 = tpu.matmul %1, %8, %cst_11 {dimension_numbers = #tpu.dot_dimension_numbers<[1], [0], [0], [1], [0, 0, 1, 1], [], []>} : vector<16x128xf32>, vector<128x128xf32>, vector<16x128xf32> -> vector<16x128xf32>
    %c0_12 = arith.constant 0 : index
    %c0_13 = arith.constant 0 : index
    %10 = vector.load %arg6[%c0_12, %c0_13] : memref<1x128xf32, #tpu.memory_space<vmem>>, vector<1x128xf32>
    %11 = vector.broadcast %10 : vector<1x128xf32> to vector<16x128xf32>
    %12 = arith.addf %9, %11 : vector<16x128xf32>
    %c0_14 = arith.constant 0 : index
    %c0_15 = arith.constant 0 : index
    %13 = vector.load %arg7[%c0_14, %c0_15] : memref<128x128xf32, #tpu.memory_space<vmem>>, vector<128x128xf32>
    %cst_16 = arith.constant dense<0.000000e+00> : vector<16x128xf32>
    %14 = tpu.matmul %2, %13, %cst_16 {dimension_numbers = #tpu.dot_dimension_numbers<[1], [0], [0], [1], [0, 0, 1, 1], [], []>} : vector<16x128xf32>, vector<128x128xf32>, vector<16x128xf32> -> vector<16x128xf32>
    %c0_17 = arith.constant 0 : index
    %c0_18 = arith.constant 0 : index
    %15 = vector.load %arg8[%c0_17, %c0_18] : memref<1x128xf32, #tpu.memory_space<vmem>>, vector<1x128xf32>
    %16 = vector.broadcast %15 : vector<1x128xf32> to vector<16x128xf32>
    %17 = arith.addf %14, %16 : vector<16x128xf32>
    %18 = vector.shape_cast %7 : vector<16x128xf32> to vector<2x8x128xf32>
    %19 = vector.shape_cast %12 : vector<16x128xf32> to vector<2x8x128xf32>
    %20 = vector.shape_cast %17 : vector<16x128xf32> to vector<2x8x128xf32>
    %21 = tpu.iota {dimensions = array<i32: 2>} : vector<1x1x128xi32>
    %cst_19 = arith.constant 0.000000e+00 : f32
    %22 = vector.broadcast %cst_19 : f32 to vector<2x8x128xf32>
    %c0_i32 = arith.constant 0 : i32
    %23 = vector.broadcast %c0_i32 : i32 to vector<1x1x128xi32>
    %24 = arith.cmpi sge, %21, %23 : vector<1x1x128xi32>
    %c32_i32 = arith.constant 32 : i32
    %25 = vector.broadcast %c32_i32 : i32 to vector<1x1x128xi32>
    %26 = arith.cmpi slt, %21, %25 : vector<1x1x128xi32>
    %27 = arith.andi %24, %26 : vector<1x1x128xi1>
    %cst_20 = arith.constant 0.000000e+00 : f32
    %28 = vector.shape_cast %27 : vector<1x1x128xi1> to vector<1x1x128xi1>
    %29 = vector.broadcast %28 : vector<1x1x128xi1> to vector<2x8x128xi1>
    %30 = vector.broadcast %cst_20 : f32 to vector<2x8x128xf32>
    %31 = arith.select %29, %19, %30 : vector<2x8x128xi1>, vector<2x8x128xf32>
    %cst_21 = arith.constant 0.000000e+00 : f32
    %32 = vector.shape_cast %27 : vector<1x1x128xi1> to vector<1x1x128xi1>
    %33 = vector.broadcast %32 : vector<1x1x128xi1> to vector<2x8x128xi1>
    %34 = vector.broadcast %cst_21 : f32 to vector<2x8x128xf32>
    %35 = arith.select %33, %20, %34 : vector<2x8x128xi1>, vector<2x8x128xf32>
    "tpu.trace_start"() <{level = 10 : i32, message = "bqd,bkd->bqk"}> : () -> ()
    %cst_22 = arith.constant dense<0.000000e+00> : vector<2x8x8xf32>
    %36 = tpu.matmul %18, %31, %cst_22 {dimension_numbers = #tpu.dot_dimension_numbers<[2], [2], [1], [1], [0, 0, 0, 1, 1, 1], [0], [0]>} : vector<2x8x128xf32>, vector<2x8x128xf32>, vector<2x8x8xf32> -> vector<2x8x8xf32>
    "tpu.trace_stop"() : () -> ()
    %cst_23 = arith.constant dense<0xFF800000> : vector<2x8xf32>
    %37 = vector.multi_reduction <maximumf>, %36, %cst_23 [2] : vector<2x8x8xf32> to vector<2x8xf32>
    %38 = vector.shape_cast %37 : vector<2x8xf32> to vector<2x8x1xf32>
    %39 = vector.broadcast %38 : vector<2x8x1xf32> to vector<2x8x8xf32>
    %40 = arith.subf %36, %39 : vector<2x8x8xf32>
    %41 = math.exp %40 : vector<2x8x8xf32>
    %cst_24 = arith.constant dense<0.000000e+00> : vector<2x8xf32>
    %42 = vector.multi_reduction <add>, %41, %cst_24 [2] : vector<2x8x8xf32> to vector<2x8xf32>
    %43 = vector.shape_cast %42 : vector<2x8xf32> to vector<2x8x1xf32>
    %44 = vector.broadcast %43 : vector<2x8x1xf32> to vector<2x8x8xf32>
    %45 = arith.divf %41, %44 : vector<2x8x8xf32>
    "tpu.trace_start"() <{level = 10 : i32, message = "bqk,bkd->bqd"}> : () -> ()
    %cst_25 = arith.constant dense<0.000000e+00> : vector<2x8x128xf32>
    %46 = tpu.matmul %45, %35, %cst_25 {dimension_numbers = #tpu.dot_dimension_numbers<[2], [1], [1], [2], [0, 0, 0, 1, 1, 2], [0], [0]>} : vector<2x8x8xf32>, vector<2x8x128xf32>, vector<2x8x128xf32> -> vector<2x8x128xf32>
    "tpu.trace_stop"() : () -> ()
    %47 = arith.addf %22, %46 : vector<2x8x128xf32>
    %c32_i32_26 = arith.constant 32 : i32
    %48 = vector.broadcast %c32_i32_26 : i32 to vector<1x1x128xi32>
    %49 = arith.cmpi sge, %21, %48 : vector<1x1x128xi32>
    %c64_i32 = arith.constant 64 : i32
    %50 = vector.broadcast %c64_i32 : i32 to vector<1x1x128xi32>
    %51 = arith.cmpi slt, %21, %50 : vector<1x1x128xi32>
    %52 = arith.andi %49, %51 : vector<1x1x128xi1>
    %cst_27 = arith.constant 0.000000e+00 : f32
    %53 = vector.shape_cast %52 : vector<1x1x128xi1> to vector<1x1x128xi1>
    %54 = vector.broadcast %53 : vector<1x1x128xi1> to vector<2x8x128xi1>
    %55 = vector.broadcast %cst_27 : f32 to vector<2x8x128xf32>
    %56 = arith.select %54, %19, %55 : vector<2x8x128xi1>, vector<2x8x128xf32>
    %cst_28 = arith.constant 0.000000e+00 : f32
    %57 = vector.shape_cast %52 : vector<1x1x128xi1> to vector<1x1x128xi1>
    %58 = vector.broadcast %57 : vector<1x1x128xi1> to vector<2x8x128xi1>
    %59 = vector.broadcast %cst_28 : f32 to vector<2x8x128xf32>
    %60 = arith.select %58, %20, %59 : vector<2x8x128xi1>, vector<2x8x128xf32>
    "tpu.trace_start"() <{level = 10 : i32, message = "bqd,bkd->bqk"}> : () -> ()
    %cst_29 = arith.constant dense<0.000000e+00> : vector<2x8x8xf32>
    %61 = tpu.matmul %18, %56, %cst_29 {dimension_numbers = #tpu.dot_dimension_numbers<[2], [2], [1], [1], [0, 0, 0, 1, 1, 1], [0], [0]>} : vector<2x8x128xf32>, vector<2x8x128xf32>, vector<2x8x8xf32> -> vector<2x8x8xf32>
    "tpu.trace_stop"() : () -> ()
    %cst_30 = arith.constant dense<0xFF800000> : vector<2x8xf32>
    %62 = vector.multi_reduction <maximumf>, %61, %cst_30 [2] : vector<2x8x8xf32> to vector<2x8xf32>
    %63 = vector.shape_cast %62 : vector<2x8xf32> to vector<2x8x1xf32>
    %64 = vector.broadcast %63 : vector<2x8x1xf32> to vector<2x8x8xf32>
    %65 = arith.subf %61, %64 : vector<2x8x8xf32>
    %66 = math.exp %65 : vector<2x8x8xf32>
    %cst_31 = arith.constant dense<0.000000e+00> : vector<2x8xf32>
    %67 = vector.multi_reduction <add>, %66, %cst_31 [2] : vector<2x8x8xf32> to vector<2x8xf32>
    %68 = vector.shape_cast %67 : vector<2x8xf32> to vector<2x8x1xf32>
    %69 = vector.broadcast %68 : vector<2x8x1xf32> to vector<2x8x8xf32>
    %70 = arith.divf %66, %69 : vector<2x8x8xf32>
    "tpu.trace_start"() <{level = 10 : i32, message = "bqk,bkd->bqd"}> : () -> ()
    %cst_32 = arith.constant dense<0.000000e+00> : vector<2x8x128xf32>
    %71 = tpu.matmul %70, %60, %cst_32 {dimension_numbers = #tpu.dot_dimension_numbers<[2], [1], [1], [2], [0, 0, 0, 1, 1, 2], [0], [0]>} : vector<2x8x8xf32>, vector<2x8x128xf32>, vector<2x8x128xf32> -> vector<2x8x128xf32>
    "tpu.trace_stop"() : () -> ()
    %72 = arith.addf %47, %71 : vector<2x8x128xf32>
    %c64_i32_33 = arith.constant 64 : i32
    %73 = vector.broadcast %c64_i32_33 : i32 to vector<1x1x128xi32>
    %74 = arith.cmpi sge, %21, %73 : vector<1x1x128xi32>
    %c96_i32 = arith.constant 96 : i32
    %75 = vector.broadcast %c96_i32 : i32 to vector<1x1x128xi32>
    %76 = arith.cmpi slt, %21, %75 : vector<1x1x128xi32>
    %77 = arith.andi %74, %76 : vector<1x1x128xi1>
    %cst_34 = arith.constant 0.000000e+00 : f32
    %78 = vector.shape_cast %77 : vector<1x1x128xi1> to vector<1x1x128xi1>
    %79 = vector.broadcast %78 : vector<1x1x128xi1> to vector<2x8x128xi1>
    %80 = vector.broadcast %cst_34 : f32 to vector<2x8x128xf32>
    %81 = arith.select %79, %19, %80 : vector<2x8x128xi1>, vector<2x8x128xf32>
    %cst_35 = arith.constant 0.000000e+00 : f32
    %82 = vector.shape_cast %77 : vector<1x1x128xi1> to vector<1x1x128xi1>
    %83 = vector.broadcast %82 : vector<1x1x128xi1> to vector<2x8x128xi1>
    %84 = vector.broadcast %cst_35 : f32 to vector<2x8x128xf32>
    %85 = arith.select %83, %20, %84 : vector<2x8x128xi1>, vector<2x8x128xf32>
    "tpu.trace_start"() <{level = 10 : i32, message = "bqd,bkd->bqk"}> : () -> ()
    %cst_36 = arith.constant dense<0.000000e+00> : vector<2x8x8xf32>
    %86 = tpu.matmul %18, %81, %cst_36 {dimension_numbers = #tpu.dot_dimension_numbers<[2], [2], [1], [1], [0, 0, 0, 1, 1, 1], [0], [0]>} : vector<2x8x128xf32>, vector<2x8x128xf32>, vector<2x8x8xf32> -> vector<2x8x8xf32>
    "tpu.trace_stop"() : () -> ()
    %cst_37 = arith.constant dense<0xFF800000> : vector<2x8xf32>
    %87 = vector.multi_reduction <maximumf>, %86, %cst_37 [2] : vector<2x8x8xf32> to vector<2x8xf32>
    %88 = vector.shape_cast %87 : vector<2x8xf32> to vector<2x8x1xf32>
    %89 = vector.broadcast %88 : vector<2x8x1xf32> to vector<2x8x8xf32>
    %90 = arith.subf %86, %89 : vector<2x8x8xf32>
    %91 = math.exp %90 : vector<2x8x8xf32>
    %cst_38 = arith.constant dense<0.000000e+00> : vector<2x8xf32>
    %92 = vector.multi_reduction <add>, %91, %cst_38 [2] : vector<2x8x8xf32> to vector<2x8xf32>
    %93 = vector.shape_cast %92 : vector<2x8xf32> to vector<2x8x1xf32>
    %94 = vector.broadcast %93 : vector<2x8x1xf32> to vector<2x8x8xf32>
    %95 = arith.divf %91, %94 : vector<2x8x8xf32>
    "tpu.trace_start"() <{level = 10 : i32, message = "bqk,bkd->bqd"}> : () -> ()
    %cst_39 = arith.constant dense<0.000000e+00> : vector<2x8x128xf32>
    %96 = tpu.matmul %95, %85, %cst_39 {dimension_numbers = #tpu.dot_dimension_numbers<[2], [1], [1], [2], [0, 0, 0, 1, 1, 2], [0], [0]>} : vector<2x8x8xf32>, vector<2x8x128xf32>, vector<2x8x128xf32> -> vector<2x8x128xf32>
    "tpu.trace_stop"() : () -> ()
    %97 = arith.addf %72, %96 : vector<2x8x128xf32>
    %c96_i32_40 = arith.constant 96 : i32
    %98 = vector.broadcast %c96_i32_40 : i32 to vector<1x1x128xi32>
    %99 = arith.cmpi sge, %21, %98 : vector<1x1x128xi32>
    %c128_i32 = arith.constant 128 : i32
    %100 = vector.broadcast %c128_i32 : i32 to vector<1x1x128xi32>
    %101 = arith.cmpi slt, %21, %100 : vector<1x1x128xi32>
    %102 = arith.andi %99, %101 : vector<1x1x128xi1>
    %cst_41 = arith.constant 0.000000e+00 : f32
    %103 = vector.shape_cast %102 : vector<1x1x128xi1> to vector<1x1x128xi1>
    %104 = vector.broadcast %103 : vector<1x1x128xi1> to vector<2x8x128xi1>
    %105 = vector.broadcast %cst_41 : f32 to vector<2x8x128xf32>
    %106 = arith.select %104, %19, %105 : vector<2x8x128xi1>, vector<2x8x128xf32>
    %cst_42 = arith.constant 0.000000e+00 : f32
    %107 = vector.shape_cast %102 : vector<1x1x128xi1> to vector<1x1x128xi1>
    %108 = vector.broadcast %107 : vector<1x1x128xi1> to vector<2x8x128xi1>
    %109 = vector.broadcast %cst_42 : f32 to vector<2x8x128xf32>
    %110 = arith.select %108, %20, %109 : vector<2x8x128xi1>, vector<2x8x128xf32>
    "tpu.trace_start"() <{level = 10 : i32, message = "bqd,bkd->bqk"}> : () -> ()
    %cst_43 = arith.constant dense<0.000000e+00> : vector<2x8x8xf32>
    %111 = tpu.matmul %18, %106, %cst_43 {dimension_numbers = #tpu.dot_dimension_numbers<[2], [2], [1], [1], [0, 0, 0, 1, 1, 1], [0], [0]>} : vector<2x8x128xf32>, vector<2x8x128xf32>, vector<2x8x8xf32> -> vector<2x8x8xf32>
    "tpu.trace_stop"() : () -> ()
    %cst_44 = arith.constant dense<0xFF800000> : vector<2x8xf32>
    %112 = vector.multi_reduction <maximumf>, %111, %cst_44 [2] : vector<2x8x8xf32> to vector<2x8xf32>
    %113 = vector.shape_cast %112 : vector<2x8xf32> to vector<2x8x1xf32>
    %114 = vector.broadcast %113 : vector<2x8x1xf32> to vector<2x8x8xf32>
    %115 = arith.subf %111, %114 : vector<2x8x8xf32>
    %116 = math.exp %115 : vector<2x8x8xf32>
    %cst_45 = arith.constant dense<0.000000e+00> : vector<2x8xf32>
    %117 = vector.multi_reduction <add>, %116, %cst_45 [2] : vector<2x8x8xf32> to vector<2x8xf32>
    %118 = vector.shape_cast %117 : vector<2x8xf32> to vector<2x8x1xf32>
    %119 = vector.broadcast %118 : vector<2x8x1xf32> to vector<2x8x8xf32>
    %120 = arith.divf %116, %119 : vector<2x8x8xf32>
    "tpu.trace_start"() <{level = 10 : i32, message = "bqk,bkd->bqd"}> : () -> ()
    %cst_46 = arith.constant dense<0.000000e+00> : vector<2x8x128xf32>
    %121 = tpu.matmul %120, %110, %cst_46 {dimension_numbers = #tpu.dot_dimension_numbers<[2], [1], [1], [2], [0, 0, 0, 1, 1, 2], [0], [0]>} : vector<2x8x8xf32>, vector<2x8x128xf32>, vector<2x8x128xf32> -> vector<2x8x128xf32>
    "tpu.trace_stop"() : () -> ()
    %122 = arith.addf %97, %121 : vector<2x8x128xf32>
    %123 = vector.shape_cast %122 : vector<2x8x128xf32> to vector<16x128xf32>
    %c0_47 = arith.constant 0 : index
    %c0_48 = arith.constant 0 : index
    %124 = vector.load %arg9[%c0_47, %c0_48] : memref<128x128xf32, #tpu.memory_space<vmem>>, vector<128x128xf32>
    %cst_49 = arith.constant dense<0.000000e+00> : vector<16x128xf32>
    %125 = tpu.matmul %123, %124, %cst_49 {dimension_numbers = #tpu.dot_dimension_numbers<[1], [0], [0], [1], [0, 0, 1, 1], [], []>} : vector<16x128xf32>, vector<128x128xf32>, vector<16x128xf32> -> vector<16x128xf32>
    %c0_50 = arith.constant 0 : index
    %c0_51 = arith.constant 0 : index
    %126 = vector.load %arg10[%c0_50, %c0_51] : memref<1x128xf32, #tpu.memory_space<vmem>>, vector<1x128xf32>
    %127 = vector.broadcast %126 : vector<1x128xf32> to vector<16x128xf32>
    %128 = arith.addf %125, %127 : vector<16x128xf32>
    %c0_52 = arith.constant 0 : index
    %c0_53 = arith.constant 0 : index
    %129 = vector.load %arg11[%c0_52, %c0_53] : memref<16x128xf32, #tpu.memory_space<vmem>>, vector<16x128xf32>
    tpu.vector_store %arg11[%c0_52, %c0_53], %128 {strides = array<i32>} : memref<16x128xf32, #tpu.memory_space<vmem>>, vector<16x128xf32>,
    return
  }
}

</mosaic_0001>

<llo_original>
// kernel: multi_head_attention.1
$region0: #{multi_head_attention.1}
  #allocation0 [shape = 'u32[]', space=smem, size = 0x4, offset = 0x4, fixed_abs, tag = 'smem constant byte address 0x4 - core index']
  #allocation1 [shape = 'u32[144,128]{1,0:T(1,128)}', space=vmem, size = 0x12000, scoped, tag = 'internal scratch']
  %s0 = inlined_call_operand.hbm [shape: f32[16,128], index: 0, kind: input, shape index: {}]
  %s1 = inlined_call_operand.hbm [shape: f32[16,128], index: 1, kind: input, shape index: {}]
  %s2 = inlined_call_operand.vmem [shape: f32[16,128], index: 2, kind: input, shape index: {}]
  %s3 = inlined_call_operand.hbm [shape: f32[128,128], index: 3, kind: input, shape index: {}]
  %s4 = inlined_call_operand.vmem [shape: f32[1,128], index: 4, kind: input, shape index: {}]
  %s5 = inlined_call_operand.hbm [shape: f32[128,128], index: 5, kind: input, shape index: {}]
  %s6 = inlined_call_operand.vmem [shape: f32[1,128], index: 6, kind: input, shape index: {}]
  %s7 = inlined_call_operand.hbm [shape: f32[128,128], index: 7, kind: input, shape index: {}]
  %s8 = inlined_call_operand.vmem [shape: f32[1,128], index: 8, kind: input, shape index: {}]
  %s9 = inlined_call_operand.hbm [shape: f32[128,128], index: 9, kind: input, shape index: {}]
  %s10 = inlined_call_operand.vmem [shape: f32[1,128], index: 10, kind: input, shape index: {}]
  %s11 = inlined_call_operand.hbm [shape: f32[16,128], index: 11, kind: output, shape index: {}]
  %s12 = sld [smem:[#allocation0]]
  $region78: #{multi_head_attention.1} parent=0
    _
  %s14 = ssub.s32 1, %s12
  %s15 = scalar_select 0, %s14, %s12
  $region1: #{multi_head_attention.1} parent=0
    #allocation2 [shape = 'u8[8192]{0}', space=vmem, size = 0x2000, scoped, tag = 'input window, operand 0, single buffered']
    #allocation3 [shape = 's32[1]{0}', space=sflag, size = 0x4, scoped, tag = 'scoped memory for multi_head_attention.1']
    #allocation4 [shape = 's32[1]{0}', space=sflag, size = 0x4, scoped, tag = 'scoped memory for multi_head_attention.1']
    #allocation5 [shape = 'u8[8192]{0}', space=vmem, size = 0x2000, scoped, tag = 'input window, operand 1, single buffered']
    #allocation6 [shape = 's32[1]{0}', space=sflag, size = 0x4, scoped, tag = 'scoped memory for multi_head_attention.1']
    #allocation7 [shape = 'u8[65536]{0}', space=vmem, size = 0x10000, scoped, tag = 'input window, operand 3, single buffered']
    #allocation8 [shape = 'u8[65536]{0}', space=vmem, size = 0x10000, scoped, tag = 'input window, operand 5, single buffered']
    #allocation9 [shape = 's32[1]{0}', space=sflag, size = 0x4, scoped, tag = 'scoped memory for multi_head_attention.1']
    #allocation10 [shape = 'u8[65536]{0}', space=vmem, size = 0x10000, scoped, tag = 'input window, operand 7, single buffered']
    #allocation11 [shape = 'u8[65536]{0}', space=vmem, size = 0x10000, scoped, tag = 'input window, operand 9, single buffered']
    #allocation12 [shape = 's32[1]{0}', space=sflag, size = 0x4, scoped, tag = 'scoped memory for multi_head_attention.1']
    #allocation13 [shape = 'u8[8192]{0}', space=vmem, size = 0x2000, scoped, tag = 'output window, operand 0, single buffered']
    %16 = vsyncpa [#allocation3], 0
    %17 = vsyncpa [#allocation6], 0
    %18 = vsyncpa [#allocation9], 0
    %19 = vsyncpa [#allocation12], 0
    %20 = vsyncpa [#allocation4], 0
    // Predicated region
    $region2: #{multi_head_attention.1} parent=1 // pred_check
      _
    $region3: #{multi_head_attention.1} parent=1 // pred_check_branch
      %22 = sbr.rel (0) target = $region5
    $region4: #{multi_head_attention.1} parent=1 // pred_region
      %s24 = ssub.s32 256, 256
      %25 = vsyncadd [#allocation3], %s24
      %s26 = sshll.u32 [#allocation2], 4
      %s27 = int_to_ptr.vmem [resolvable:$true] %s26
      %32 = dma.hbm_to_vmem [thread:$0]  %s0, 256, %s27, [#allocation3], 128, 128, 8
    $region5: #{multi_head_attention.1} parent=1 // pred_fallthru
      _
    // Predicated region
    $region6: #{multi_head_attention.1} parent=1 // pred_check
      _
    $region7: #{multi_head_attention.1} parent=1 // pred_check_branch
      %34 = sbr.rel (0) target = $region9
    $region8: #{multi_head_attention.1} parent=1 // pred_region
      %s36 = ssub.s32 256, 256
      %37 = vsyncadd [#allocation6], %s36
      %s38 = sshll.u32 [#allocation5], 4
      %s39 = int_to_ptr.vmem [resolvable:$true] %s38
      %44 = dma.hbm_to_vmem [thread:$0]  %s1, 256, %s39, [#allocation6], 128, 128, 8
    $region9: #{multi_head_attention.1} parent=1 // pred_fallthru
      _
    // Predicated region
    $region10: #{multi_head_attention.1} parent=1 // pred_check
      _
    $region11: #{multi_head_attention.1} parent=1 // pred_check_branch
      %46 = sbr.rel (0) target = $region13
    $region12: #{multi_head_attention.1} parent=1 // pred_region
      _
    $region13: #{multi_head_attention.1} parent=1 // pred_fallthru
      _
    // Predicated region
    $region14: #{multi_head_attention.1} parent=1 // pred_check
      _
    $region15: #{multi_head_attention.1} parent=1 // pred_check_branch
      %48 = sbr.rel (0) target = $region17
    $region16: #{multi_head_attention.1} parent=1 // pred_region
      %s50 = ssub.s32 2048, 2048
      %51 = vsyncadd [#allocation6], %s50
      %s52 = sshll.u32 [#allocation7], 4
      %s53 = int_to_ptr.vmem [resolvable:$true] %s52
      %58 = dma.hbm_to_vmem [thread:$0]  %s3, 2048, %s53, [#allocation6], 128, 128, 8
    $region17: #{multi_head_attention.1} parent=1 // pred_fallthru
      _
    // Predicated region
    $region18: #{multi_head_attention.1} parent=1 // pred_check
      _
    $region19: #{multi_head_attention.1} parent=1 // pred_check_branch
      %60 = sbr.rel (0) target = $region21
    $region20: #{multi_head_attention.1} parent=1 // pred_region
      _
    $region21: #{multi_head_attention.1} parent=1 // pred_fallthru
      _
    // Predicated region
    $region22: #{multi_head_attention.1} parent=1 // pred_check
      _
    $region23: #{multi_head_attention.1} parent=1 // pred_check_branch
      %62 = sbr.rel (0) target = $region25
    $region24: #{multi_head_attention.1} parent=1 // pred_region
      %s64 = ssub.s32 2048, 2048
      %65 = vsyncadd [#allocation9], %s64
      %s66 = sshll.u32 [#allocation8], 4
      %s67 = int_to_ptr.vmem [resolvable:$true] %s66
      %72 = dma.hbm_to_vmem [thread:$0]  %s5, 2048, %s67, [#allocation9], 128, 128, 8
    $region25: #{multi_head_attention.1} parent=1 // pred_fallthru
      _
    // Predicated region
    $region26: #{multi_head_attention.1} parent=1 // pred_check
      _
    $region27: #{multi_head_attention.1} parent=1 // pred_check_branch
      %74 = sbr.rel (0) target = $region29
    $region28: #{multi_head_attention.1} parent=1 // pred_region
      _
    $region29: #{multi_head_attention.1} parent=1 // pred_fallthru
      _
    // Predicated region
    $region30: #{multi_head_attention.1} parent=1 // pred_check
      _
    $region31: #{multi_head_attention.1} parent=1 // pred_check_branch
      %76 = sbr.rel (0) target = $region33
    $region32: #{multi_head_attention.1} parent=1 // pred_region
      %s78 = ssub.s32 2048, 2048
      %79 = vsyncadd [#allocation9], %s78
      %s80 = sshll.u32 [#allocation10], 4
      %s81 = int_to_ptr.vmem [resolvable:$true] %s80
      %86 = dma.hbm_to_vmem [thread:$0]  %s7, 2048, %s81, [#allocation9], 128, 128, 8
    $region33: #{multi_head_attention.1} parent=1 // pred_fallthru
      _
    // Predicated region
    $region34: #{multi_head_attention.1} parent=1 // pred_check
      _
    $region35: #{multi_head_attention.1} parent=1 // pred_check_branch
      %88 = sbr.rel (0) target = $region37
    $region36: #{multi_head_attention.1} parent=1 // pred_region
      _
    $region37: #{multi_head_attention.1} parent=1 // pred_fallthru
      _
    // Predicated region
    $region38: #{multi_head_attention.1} parent=1 // pred_check
      _
    $region39: #{multi_head_attention.1} parent=1 // pred_check_branch
      %90 = sbr.rel (0) target = $region41
    $region40: #{multi_head_attention.1} parent=1 // pred_region
      %s92 = ssub.s32 2048, 2048
      %93 = vsyncadd [#allocation12], %s92
      %s94 = sshll.u32 [#allocation11], 4
      %s95 = int_to_ptr.vmem [resolvable:$true] %s94
      %100 = dma.hbm_to_vmem [thread:$0]  %s9, 2048, %s95, [#allocation12], 128, 128, 8
    $region41: #{multi_head_attention.1} parent=1 // pred_fallthru
      _
    // Predicated region
    $region42: #{multi_head_attention.1} parent=1 // pred_check
      _
    $region43: #{multi_head_attention.1} parent=1 // pred_check_branch
      %102 = sbr.rel (0) target = $region45
    $region44: #{multi_head_attention.1} parent=1 // pred_region
      _
    $region45: #{multi_head_attention.1} parent=1 // pred_fallthru
      _
    // Predicated region
    $region46: #{multi_head_attention.1} parent=1 // pred_check
      _
    $region47: #{multi_head_attention.1} parent=1 // pred_check_branch
      %104 = sbr.rel (0) target = $region49
    $region48: #{multi_head_attention.1} parent=1 // pred_region
      %105 = dma.done [#allocation3], 256
    $region49: #{multi_head_attention.1} parent=1 // pred_fallthru
      _
    // Predicated region
    $region50: #{multi_head_attention.1} parent=1 // pred_check
      _
    $region51: #{multi_head_attention.1} parent=1 // pred_check_branch
      %107 = sbr.rel (0) target = $region53
    $region52: #{multi_head_attention.1} parent=1 // pred_region
      %108 = dma.done [#allocation6], 256
    $region53: #{multi_head_attention.1} parent=1 // pred_fallthru
      _
    // Predicated region
    $region54: #{multi_head_attention.1} parent=1 // pred_check
      _
    $region55: #{multi_head_attention.1} parent=1 // pred_check_branch
      %110 = sbr.rel (0) target = $region57
    $region56: #{multi_head_attention.1} parent=1 // pred_region
      %111 = dma.done [#allocation6], 2048
    $region57: #{multi_head_attention.1} parent=1 // pred_fallthru
      _
    // Predicated region
    $region58: #{multi_head_attention.1} parent=1 // pred_check
      _
    $region59: #{multi_head_attention.1} parent=1 // pred_check_branch
      %113 = sbr.rel (0) target = $region61
    $region60: #{multi_head_attention.1} parent=1 // pred_region
      %114 = dma.done [#allocation9], 2048
    $region61: #{multi_head_attention.1} parent=1 // pred_fallthru
      _
    // Predicated region
    $region62: #{multi_head_attention.1} parent=1 // pred_check
      _
    $region63: #{multi_head_attention.1} parent=1 // pred_check_branch
      %116 = sbr.rel (0) target = $region65
    $region64: #{multi_head_attention.1} parent=1 // pred_region
      %117 = dma.done [#allocation9], 2048
    $region65: #{multi_head_attention.1} parent=1 // pred_fallthru
      _
    // Predicated region
    $region66: #{multi_head_attention.1} parent=1 // pred_check
      _
    $region67: #{multi_head_attention.1} parent=1 // pred_check_branch
      %119 = sbr.rel (0) target = $region69
    $region68: #{multi_head_attention.1} parent=1 // pred_region
      %120 = dma.done [#allocation12], 2048
    $region69: #{multi_head_attention.1} parent=1 // pred_fallthru
      _
    %v121 = vld [vmem:[#allocation2] sm:$0xff]
    %v122 = vld [vmem:[#allocation2 + $0x8] sm:$0xff]
    %v123 = vld [vmem:[#allocation5] sm:$0xff]
    %v124 = vld [vmem:[#allocation5 + $0x8] sm:$0xff]
    %v125 = vld [vmem:[%s2] sm:$0xff]
    %v126 = vld [vmem:[%s2 + $0x8] sm:$0xff]
    %v127 = vld [vmem:[#allocation7] sm:$0xff]
    %v128 = vld [vmem:[#allocation7 + $0x8] sm:$0xff]
    %v129 = vld [vmem:[#allocation7 + $0x10] sm:$0xff]
    %v130 = vld [vmem:[#allocation7 + $0x18] sm:$0xff]
    %v131 = vld [vmem:[#allocation7 + $0x20] sm:$0xff]
    %v132 = vld [vmem:[#allocation7 + $0x28] sm:$0xff]
    %v133 = vld [vmem:[#allocation7 + $0x30] sm:$0xff]
    %v134 = vld [vmem:[#allocation7 + $0x38] sm:$0xff]
    %v135 = vld [vmem:[#allocation7 + $0x40] sm:$0xff]
    %v136 = vld [vmem:[#allocation7 + $0x48] sm:$0xff]
    %v137 = vld [vmem:[#allocation7 + $0x50] sm:$0xff]
    %v138 = vld [vmem:[#allocation7 + $0x58] sm:$0xff]
    %v139 = vld [vmem:[#allocation7 + $0x60] sm:$0xff]
    %v140 = vld [vmem:[#allocation7 + $0x68] sm:$0xff]
    %v141 = vld [vmem:[#allocation7 + $0x70] sm:$0xff]
    %v142 = vld [vmem:[#allocation7 + $0x78] sm:$0xff]
    %v143 = vld [vmem:[%s4] sm:$0x1]
    %v145 = vlaneseq
    %v146 = vshrl.u32 %v145, 7
    %v147 = vsub.s32 0, %v146
    %v148 = vrot.slane %v143, %v147
    %150 = vmatprep.subr.mxu0 0.0
    %151 = vmatpush1.msra.mxu0 %v127
    %152 = vmatprep.subr.mxu0 0.0
    %153 = vmatpush1.msra.mxu0 %v128
    %154 = vmatprep.subr.mxu0 0.0
    %155 = vmatpush1.msra.mxu0 %v129
    %156 = vmatprep.subr.mxu0 0.0
    %157 = vmatpush1.msra.mxu0 %v130
    %158 = vmatprep.subr.mxu0 0.0
    %159 = vmatpush1.msra.mxu0 %v131
    %160 = vmatprep.subr.mxu0 0.0
    %161 = vmatpush1.msra.mxu0 %v132
    %162 = vmatprep.subr.mxu0 0.0
    %163 = vmatpush1.msra.mxu0 %v133
    %164 = vmatprep.subr.mxu0 0.0
    %165 = vmatpush1.msra.mxu0 %v134
    %166 = vmatprep.subr.mxu0 0.0
    %167 = vmatpush1.msra.mxu0 %v135
    %168 = vmatprep.subr.mxu0 0.0
    %169 = vmatpush1.msra.mxu0 %v136
    %170 = vmatprep.subr.mxu0 0.0
    %171 = vmatpush1.msra.mxu0 %v137
    %172 = vmatprep.subr.mxu0 0.0
    %173 = vmatpush1.msra.mxu0 %v138
    %174 = vmatprep.subr.mxu0 0.0
    %175 = vmatpush1.msra.mxu0 %v139
    %176 = vmatprep.subr.mxu0 0.0
    %177 = vmatpush1.msra.mxu0 %v140
    %178 = vmatprep.subr.mxu0 0.0
    %179 = vmatpush1.msra.mxu0 %v141
    %180 = vmatprep.subr.mxu0 0.0
    %181 = vmatpush1.msra.mxu0 %v142
    %182 = vmatprep.subr.mxu0 0.0
    %183 = vmatpush1.msra.mxu0 0.0
    %184 = vmatprep.subr.mxu0 0.0
    %185 = vmatpush1.msra.mxu0 0.0
    %186 = vmatprep.subr.mxu0 0.0
    %187 = vmatpush1.msra.mxu0 0.0
    %188 = vmatprep.subr.mxu0 0.0
    %189 = vmatpush1.msra.mxu0 0.0
    %190 = vmatprep.subr.mxu0 0.0
    %191 = vmatpush1.msra.mxu0 0.0
    %192 = vmatprep.subr.mxu0 0.0
    %193 = vmatpush1.msra.mxu0 0.0
    %194 = vmatprep.subr.mxu0 0.0
    %195 = vmatpush1.msra.mxu0 0.0
    %196 = vmatprep.subr.mxu0 0.0
    %197 = vmatpush1.msra.mxu0 0.0
    %198 = vmatprep.subr.mxu0 0.0
    %199 = vmatpush1.msra.mxu0 0.0
    %200 = vmatprep.subr.mxu0 0.0
    %201 = vmatpush1.msra.mxu0 0.0
    %202 = vmatprep.subr.mxu0 0.0
    %203 = vmatpush1.msra.mxu0 0.0
    %204 = vmatprep.subr.mxu0 0.0
    %205 = vmatpush1.msra.mxu0 0.0
    %206 = vmatprep.subr.mxu0 0.0
    %207 = vmatpush1.msra.mxu0 0.0
    %208 = vmatprep.subr.mxu0 0.0
    %209 = vmatpush1.msra.mxu0 0.0
    %210 = vmatprep.subr.mxu0 0.0
    %211 = vmatpush1.msra.mxu0 0.0
    %212 = vmatprep.subr.mxu0 0.0
    %213 = vmatpush1.msra.mxu0 0.0
    %214 = vmatprep.mubr.f32.mxu0 0.0
    %215 = vmatmul.mubr.f32.gmra.mrb[0].mxu0 %v121
    %v216 = vpop.f32.mrb[0].mxu0
    %v217 = vadd.f32 %v148, %v216
    %v218 = vpop.f32.mrb[0].mxu0
    %219 = vmatprep.mubr.f32.mxu0 0.0
    %220 = vmatmul.mubr.f32.gmra.mrb[0].mxu0 %v122
    %v221 = vpop.f32.mrb[0].mxu0
    %v222 = vadd.f32 %v148, %v221
    %v223 = vpop.f32.mrb[0].mxu0
    %224 = vdwg.mxu0
    %v225 = vld [vmem:[#allocation8] sm:$0xff]
    %v226 = vld [vmem:[#allocation8 + $0x8] sm:$0xff]
    %v227 = vld [vmem:[#allocation8 + $0x10] sm:$0xff]
    %v228 = vld [vmem:[#allocation8 + $0x18] sm:$0xff]
    %v229 = vld [vmem:[#allocation8 + $0x20] sm:$0xff]
    %v230 = vld [vmem:[#allocation8 + $0x28] sm:$0xff]
    %v231 = vld [vmem:[#allocation8 + $0x30] sm:$0xff]
    %v232 = vld [vmem:[#allocation8 + $0x38] sm:$0xff]
    %v233 = vld [vmem:[#allocation8 + $0x40] sm:$0xff]
    %v234 = vld [vmem:[#allocation8 + $0x48] sm:$0xff]
    %v235 = vld [vmem:[#allocation8 + $0x50] sm:$0xff]
    %v236 = vld [vmem:[#allocation8 + $0x58] sm:$0xff]
    %v237 = vld [vmem:[#allocation8 + $0x60] sm:$0xff]
    %v238 = vld [vmem:[#allocation8 + $0x68] sm:$0xff]
    %v239 = vld [vmem:[#allocation8 + $0x70] sm:$0xff]
    %v240 = vld [vmem:[#allocation8 + $0x78] sm:$0xff]
    %v241 = vld [vmem:[%s6] sm:$0x1]
    %v243 = vlaneseq
    %v244 = vshrl.u32 %v243, 7
    %v245 = vsub.s32 0, %v244
    %v246 = vrot.slane %v241, %v245
    %248 = vmatprep.subr.mxu0 0.0
    %249 = vmatpush1.msra.mxu0 %v225
    %250 = vmatprep.subr.mxu0 0.0
    %251 = vmatpush1.msra.mxu0 %v226
    %252 = vmatprep.subr.mxu0 0.0
    %253 = vmatpush1.msra.mxu0 %v227
    %254 = vmatprep.subr.mxu0 0.0
    %255 = vmatpush1.msra.mxu0 %v228
    %256 = vmatprep.subr.mxu0 0.0
    %257 = vmatpush1.msra.mxu0 %v229
    %258 = vmatprep.subr.mxu0 0.0
    %259 = vmatpush1.msra.mxu0 %v230
    %260 = vmatprep.subr.mxu0 0.0
    %261 = vmatpush1.msra.mxu0 %v231
    %262 = vmatprep.subr.mxu0 0.0
    %263 = vmatpush1.msra.mxu0 %v232
    %264 = vmatprep.subr.mxu0 0.0
    %265 = vmatpush1.msra.mxu0 %v233
    %266 = vmatprep.subr.mxu0 0.0
    %267 = vmatpush1.msra.mxu0 %v234
    %268 = vmatprep.subr.mxu0 0.0
    %269 = vmatpush1.msra.mxu0 %v235
    %270 = vmatprep.subr.mxu0 0.0
    %271 = vmatpush1.msra.mxu0 %v236
    %272 = vmatprep.subr.mxu0 0.0
    %273 = vmatpush1.msra.mxu0 %v237
    %274 = vmatprep.subr.mxu0 0.0
    %275 = vmatpush1.msra.mxu0 %v238
    %276 = vmatprep.subr.mxu0 0.0
    %277 = vmatpush1.msra.mxu0 %v239
    %278 = vmatprep.subr.mxu0 0.0
    %279 = vmatpush1.msra.mxu0 %v240
    %280 = vmatprep.subr.mxu0 0.0
    %281 = vmatpush1.msra.mxu0 0.0
    %282 = vmatprep.subr.mxu0 0.0
    %283 = vmatpush1.msra.mxu0 0.0
    %284 = vmatprep.subr.mxu0 0.0
    %285 = vmatpush1.msra.mxu0 0.0
    %286 = vmatprep.subr.mxu0 0.0
    %287 = vmatpush1.msra.mxu0 0.0
    %288 = vmatprep.subr.mxu0 0.0
    %289 = vmatpush1.msra.mxu0 0.0
    %290 = vmatprep.subr.mxu0 0.0
    %291 = vmatpush1.msra.mxu0 0.0
    %292 = vmatprep.subr.mxu0 0.0
    %293 = vmatpush1.msra.mxu0 0.0
    %294 = vmatprep.subr.mxu0 0.0
    %295 = vmatpush1.msra.mxu0 0.0
    %296 = vmatprep.subr.mxu0 0.0
    %297 = vmatpush1.msra.mxu0 0.0
    %298 = vmatprep.subr.mxu0 0.0
    %299 = vmatpush1.msra.mxu0 0.0
    %300 = vmatprep.subr.mxu0 0.0
    %301 = vmatpush1.msra.mxu0 0.0
    %302 = vmatprep.subr.mxu0 0.0
    %303 = vmatpush1.msra.mxu0 0.0
    %304 = vmatprep.subr.mxu0 0.0
    %305 = vmatpush1.msra.mxu0 0.0
    %306 = vmatprep.subr.mxu0 0.0
    %307 = vmatpush1.msra.mxu0 0.0
    %308 = vmatprep.subr.mxu0 0.0
    %309 = vmatpush1.msra.mxu0 0.0
    %310 = vmatprep.subr.mxu0 0.0
    %311 = vmatpush1.msra.mxu0 0.0
    %312 = vmatprep.mubr.f32.mxu0 0.0
    %313 = vmatmul.mubr.f32.gmra.mrb[0].mxu0 %v123
    %v314 = vpop.f32.mrb[0].mxu0
    %v315 = vadd.f32 %v246, %v314
    %v316 = vpop.f32.mrb[0].mxu0
    %317 = vmatprep.mubr.f32.mxu0 0.0
    %318 = vmatmul.mubr.f32.gmra.mrb[0].mxu0 %v124
    %v319 = vpop.f32.mrb[0].mxu0
    %v320 = vadd.f32 %v246, %v319
    %v321 = vpop.f32.mrb[0].mxu0
    %322 = vdwg.mxu0
    %v323 = vld [vmem:[#allocation10] sm:$0xff]
    %v324 = vld [vmem:[#allocation10 + $0x8] sm:$0xff]
    %v325 = vld [vmem:[#allocation10 + $0x10] sm:$0xff]
    %v326 = vld [vmem:[#allocation10 + $0x18] sm:$0xff]
    %v327 = vld [vmem:[#allocation10 + $0x20] sm:$0xff]
    %v328 = vld [vmem:[#allocation10 + $0x28] sm:$0xff]
    %v329 = vld [vmem:[#allocation10 + $0x30] sm:$0xff]
    %v330 = vld [vmem:[#allocation10 + $0x38] sm:$0xff]
    %v331 = vld [vmem:[#allocation10 + $0x40] sm:$0xff]
    %v332 = vld [vmem:[#allocation10 + $0x48] sm:$0xff]
    %v333 = vld [vmem:[#allocation10 + $0x50] sm:$0xff]
    %v334 = vld [vmem:[#allocation10 + $0x58] sm:$0xff]
    %v335 = vld [vmem:[#allocation10 + $0x60] sm:$0xff]
    %v336 = vld [vmem:[#allocation10 + $0x68] sm:$0xff]
    %v337 = vld [vmem:[#allocation10 + $0x70] sm:$0xff]
    %v338 = vld [vmem:[#allocation10 + $0x78] sm:$0xff]
    %v339 = vld [vmem:[%s8] sm:$0x1]
    %v341 = vlaneseq
    %v342 = vshrl.u32 %v341, 7
    %v343 = vsub.s32 0, %v342
    %v344 = vrot.slane %v339, %v343
    %346 = vmatprep.subr.mxu0 0.0
    %347 = vmatpush1.msra.mxu0 %v323
    %348 = vmatprep.subr.mxu0 0.0
    %349 = vmatpush1.msra.mxu0 %v324
    %350 = vmatprep.subr.mxu0 0.0
    %351 = vmatpush1.msra.mxu0 %v325
    %352 = vmatprep.subr.mxu0 0.0
    %353 = vmatpush1.msra.mxu0 %v326
    %354 = vmatprep.subr.mxu0 0.0
    %355 = vmatpush1.msra.mxu0 %v327
    %356 = vmatprep.subr.mxu0 0.0
    %357 = vmatpush1.msra.mxu0 %v328
    %358 = vmatprep.subr.mxu0 0.0
    %359 = vmatpush1.msra.mxu0 %v329
    %360 = vmatprep.subr.mxu0 0.0
    %361 = vmatpush1.msra.mxu0 %v330
    %362 = vmatprep.subr.mxu0 0.0
    %363 = vmatpush1.msra.mxu0 %v331
    %364 = vmatprep.subr.mxu0 0.0
    %365 = vmatpush1.msra.mxu0 %v332
    %366 = vmatprep.subr.mxu0 0.0
    %367 = vmatpush1.msra.mxu0 %v333
    %368 = vmatprep.subr.mxu0 0.0
    %369 = vmatpush1.msra.mxu0 %v334
    %370 = vmatprep.subr.mxu0 0.0
    %371 = vmatpush1.msra.mxu0 %v335
    %372 = vmatprep.subr.mxu0 0.0
    %373 = vmatpush1.msra.mxu0 %v336
    %374 = vmatprep.subr.mxu0 0.0
    %375 = vmatpush1.msra.mxu0 %v337
    %376 = vmatprep.subr.mxu0 0.0
    %377 = vmatpush1.msra.mxu0 %v338
    %378 = vmatprep.subr.mxu0 0.0
    %379 = vmatpush1.msra.mxu0 0.0
    %380 = vmatprep.subr.mxu0 0.0
    %381 = vmatpush1.msra.mxu0 0.0
    %382 = vmatprep.subr.mxu0 0.0
    %383 = vmatpush1.msra.mxu0 0.0
    %384 = vmatprep.subr.mxu0 0.0
    %385 = vmatpush1.msra.mxu0 0.0
    %386 = vmatprep.subr.mxu0 0.0
    %387 = vmatpush1.msra.mxu0 0.0
    %388 = vmatprep.subr.mxu0 0.0
    %389 = vmatpush1.msra.mxu0 0.0
    %390 = vmatprep.subr.mxu0 0.0
    %391 = vmatpush1.msra.mxu0 0.0
    %392 = vmatprep.subr.mxu0 0.0
    %393 = vmatpush1.msra.mxu0 0.0
    %394 = vmatprep.subr.mxu0 0.0
    %395 = vmatpush1.msra.mxu0 0.0
    %396 = vmatprep.subr.mxu0 0.0
    %397 = vmatpush1.msra.mxu0 0.0
    %398 = vmatprep.subr.mxu0 0.0
    %399 = vmatpush1.msra.mxu0 0.0
    %400 = vmatprep.subr.mxu0 0.0
    %401 = vmatpush1.msra.mxu0 0.0
    %402 = vmatprep.subr.mxu0 0.0
    %403 = vmatpush1.msra.mxu0 0.0
    %404 = vmatprep.subr.mxu0 0.0
    %405 = vmatpush1.msra.mxu0 0.0
    %406 = vmatprep.subr.mxu0 0.0
    %407 = vmatpush1.msra.mxu0 0.0
    %408 = vmatprep.subr.mxu0 0.0
    %409 = vmatpush1.msra.mxu0 0.0
    %410 = vmatprep.mubr.f32.mxu0 0.0
    %411 = vmatmul.mubr.f32.gmra.mrb[0].mxu0 %v125
    %v412 = vpop.f32.mrb[0].mxu0
    %v413 = vadd.f32 %v344, %v412
    %v414 = vpop.f32.mrb[0].mxu0
    %415 = vmatprep.mubr.f32.mxu0 0.0
    %416 = vmatmul.mubr.f32.gmra.mrb[0].mxu0 %v126
    %v417 = vpop.f32.mrb[0].mxu0
    %v418 = vadd.f32 %v344, %v417
    %v419 = vpop.f32.mrb[0].mxu0
    %420 = vdwg.mxu0
    %v421 = vlaneseq
    %v422 = vand.u32 %v421, 127
    %vm423 = vcmp.ge.s32.totalorder %v422, 0
    %vm424 = vcmp.lt.s32.totalorder %v422, 32
    %vm425 = vmand %vm423, %vm424
    %v426 = vsel %vm425, 1, 0
    %vm427 = vcmp.eq.s32.totalorder %v426, 1
    %v428 = vsel %vm427, %v315, 0.0
    %v429 = vsel %vm427, %v320, 0.0
    %v430 = vsel %vm427, %v413, 0.0
    %v431 = vsel %vm427, %v418, 0.0
    %432 = vmatprep.subr.mxu0 0.0
    %433 = vmatpush1.xpose.msra.mxu0 %v428
    %434 = vmatprep.subr.mxu0 0.0
    %435 = vmatpush1.xpose.msra.mxu0 0.0
    %436 = vmatprep.subr.mxu0 0.0
    %437 = vmatpush1.xpose.msra.mxu0 0.0
    %438 = vmatprep.subr.mxu0 0.0
    %439 = vmatpush1.xpose.msra.mxu0 0.0
    %440 = vmatprep.subr.mxu0 0.0
    %441 = vmatpush1.xpose.msra.mxu0 0.0
    %442 = vmatprep.subr.mxu0 0.0
    %443 = vmatpush1.xpose.msra.mxu0 0.0
    %444 = vmatprep.subr.mxu0 0.0
    %445 = vmatpush1.xpose.msra.mxu0 0.0
    %446 = vmatprep.subr.mxu0 0.0
    %447 = vmatpush1.xpose.msra.mxu0 0.0
    %448 = vmatprep.subr.mxu0 0.0
    %449 = vmatpush1.xpose.msra.mxu0 0.0
    %450 = vmatprep.subr.mxu0 0.0
    %451 = vmatpush1.xpose.msra.mxu0 0.0
    %452 = vmatprep.subr.mxu0 0.0
    %453 = vmatpush1.xpose.msra.mxu0 0.0
    %454 = vmatprep.subr.mxu0 0.0
    %455 = vmatpush1.xpose.msra.mxu0 0.0
    %456 = vmatprep.subr.mxu0 0.0
    %457 = vmatpush1.xpose.msra.mxu0 0.0
    %458 = vmatprep.subr.mxu0 0.0
    %459 = vmatpush1.xpose.msra.mxu0 0.0
    %460 = vmatprep.subr.mxu0 0.0
    %461 = vmatpush1.xpose.msra.mxu0 0.0
    %462 = vmatprep.subr.mxu0 0.0
    %463 = vmatpush1.xpose.msra.mxu0 0.0
    %464 = vmatprep.subr.mxu0 0.0
    %465 = vmatpush1.xpose.msra.mxu0 0.0
    %466 = vmatprep.subr.mxu0 0.0
    %467 = vmatpush1.xpose.msra.mxu0 0.0
    %468 = vmatprep.subr.mxu0 0.0
    %469 = vmatpush1.xpose.msra.mxu0 0.0
    %470 = vmatprep.subr.mxu0 0.0
    %471 = vmatpush1.xpose.msra.mxu0 0.0
    %472 = vmatprep.subr.mxu0 0.0
    %473 = vmatpush1.xpose.msra.mxu0 0.0
    %474 = vmatprep.subr.mxu0 0.0
    %475 = vmatpush1.xpose.msra.mxu0 0.0
    %476 = vmatprep.subr.mxu0 0.0
    %477 = vmatpush1.xpose.msra.mxu0 0.0
    %478 = vmatprep.subr.mxu0 0.0
    %479 = vmatpush1.xpose.msra.mxu0 0.0
    %480 = vmatprep.subr.mxu0 0.0
    %481 = vmatpush1.xpose.msra.mxu0 0.0
    %482 = vmatprep.subr.mxu0 0.0
    %483 = vmatpush1.xpose.msra.mxu0 0.0
    %484 = vmatprep.subr.mxu0 0.0
    %485 = vmatpush1.xpose.msra.mxu0 0.0
    %486 = vmatprep.subr.mxu0 0.0
    %487 = vmatpush1.xpose.msra.mxu0 0.0
    %488 = vmatprep.subr.mxu0 0.0
    %489 = vmatpush1.xpose.msra.mxu0 0.0
    %490 = vmatprep.subr.mxu0 0.0
    %491 = vmatpush1.xpose.msra.mxu0 0.0
    %492 = vmatprep.subr.mxu0 0.0
    %493 = vmatpush1.xpose.msra.mxu0 0.0
    %494 = vmatprep.subr.mxu0 0.0
    %495 = vmatpush1.xpose.msra.mxu0 0.0
    %496 = vmatprep.mubr.f32.mxu0 0.0
    %497 = vmatmul.mubr.f32.gmra.mrb[0].mxu0 %v217
    %v498 = vpop.f32.mrb[0].mxu0
    %v499 = vadd.f32 0.0, %v498
    %v500 = vpop.f32.mrb[0].mxu0
    %501 = vdwg.mxu0
    %502 = vmatprep.subr.mxu0 0.0
    %503 = vmatpush1.xpose.msra.mxu0 %v429
    %504 = vmatprep.subr.mxu0 0.0
    %505 = vmatpush1.xpose.msra.mxu0 0.0
    %506 = vmatprep.subr.mxu0 0.0
    %507 = vmatpush1.xpose.msra.mxu0 0.0
    %508 = vmatprep.subr.mxu0 0.0
    %509 = vmatpush1.xpose.msra.mxu0 0.0
    %510 = vmatprep.subr.mxu0 0.0
    %511 = vmatpush1.xpose.msra.mxu0 0.0
    %512 = vmatprep.subr.mxu0 0.0
    %513 = vmatpush1.xpose.msra.mxu0 0.0
    %514 = vmatprep.subr.mxu0 0.0
    %515 = vmatpush1.xpose.msra.mxu0 0.0
    %516 = vmatprep.subr.mxu0 0.0
    %517 = vmatpush1.xpose.msra.mxu0 0.0
    %518 = vmatprep.subr.mxu0 0.0
    %519 = vmatpush1.xpose.msra.mxu0 0.0
    %520 = vmatprep.subr.mxu0 0.0
    %521 = vmatpush1.xpose.msra.mxu0 0.0
    %522 = vmatprep.subr.mxu0 0.0
    %523 = vmatpush1.xpose.msra.mxu0 0.0
    %524 = vmatprep.subr.mxu0 0.0
    %525 = vmatpush1.xpose.msra.mxu0 0.0
    %526 = vmatprep.subr.mxu0 0.0
    %527 = vmatpush1.xpose.msra.mxu0 0.0
    %528 = vmatprep.subr.mxu0 0.0
    %529 = vmatpush1.xpose.msra.mxu0 0.0
    %530 = vmatprep.subr.mxu0 0.0
    %531 = vmatpush1.xpose.msra.mxu0 0.0
    %532 = vmatprep.subr.mxu0 0.0
    %533 = vmatpush1.xpose.msra.mxu0 0.0
    %534 = vmatprep.subr.mxu0 0.0
    %535 = vmatpush1.xpose.msra.mxu0 0.0
    %536 = vmatprep.subr.mxu0 0.0
    %537 = vmatpush1.xpose.msra.mxu0 0.0
    %538 = vmatprep.subr.mxu0 0.0
    %539 = vmatpush1.xpose.msra.mxu0 0.0
    %540 = vmatprep.subr.mxu0 0.0
    %541 = vmatpush1.xpose.msra.mxu0 0.0
    %542 = vmatprep.subr.mxu0 0.0
    %543 = vmatpush1.xpose.msra.mxu0 0.0
    %544 = vmatprep.subr.mxu0 0.0
    %545 = vmatpush1.xpose.msra.mxu0 0.0
    %546 = vmatprep.subr.mxu0 0.0
    %547 = vmatpush1.xpose.msra.mxu0 0.0
    %548 = vmatprep.subr.mxu0 0.0
    %549 = vmatpush1.xpose.msra.mxu0 0.0
    %550 = vmatprep.subr.mxu0 0.0
    %551 = vmatpush1.xpose.msra.mxu0 0.0
    %552 = vmatprep.subr.mxu0 0.0
    %553 = vmatpush1.xpose.msra.mxu0 0.0
    %554 = vmatprep.subr.mxu0 0.0
    %555 = vmatpush1.xpose.msra.mxu0 0.0
    %556 = vmatprep.subr.mxu0 0.0
    %557 = vmatpush1.xpose.msra.mxu0 0.0
    %558 = vmatprep.subr.mxu0 0.0
    %559 = vmatpush1.xpose.msra.mxu0 0.0
    %560 = vmatprep.subr.mxu0 0.0
    %561 = vmatpush1.xpose.msra.mxu0 0.0
    %562 = vmatprep.subr.mxu0 0.0
    %563 = vmatpush1.xpose.msra.mxu0 0.0
    %564 = vmatprep.subr.mxu0 0.0
    %565 = vmatpush1.xpose.msra.mxu0 0.0
    %566 = vmatprep.mubr.f32.mxu0 0.0
    %567 = vmatmul.mubr.f32.gmra.mrb[0].mxu0 %v222
    %v568 = vpop.f32.mrb[0].mxu0
    %v569 = vadd.f32 0.0, %v568
    %v570 = vpop.f32.mrb[0].mxu0
    %571 = vdwg.mxu0
    %vm572 = vcmask 64512
    %v573 = vsel %vm572, %v499, -inf
    %574 = vmax.xlane.f32.xlu0 %v573
    %v575 = vpop.xlane.xlu0 %574
    %v576 = vsel %vm572, %v569, -inf
    %577 = vmax.xlane.f32.xlu0 %v576
    %v578 = vpop.xlane.xlu0 %577
    %v579 = vsub.f32 %v499, %v575
    %v580 = vsub.f32 %v569, %v578
    %v581 = vmul.f32 %v579, 1.442695
    %v582 = vpow.pop %v581
    %v583 = vmul.f32 %v580, 1.442695
    %v584 = vpow.pop %v583
    %v585 = vsel %vm572, %v582, 0.0
    %586 = vadd.xlane.f32.xlu0 %v585
    %v587 = vpop.xlane.xlu0 %586
    %v588 = vsel %vm572, %v584, 0.0
    %589 = vadd.xlane.f32.xlu0 %v588
    %v590 = vpop.xlane.xlu0 %589
    %v591 = vrcp.pop %v587
    %v592 = vmul.f32 %v582, %v591
    %v593 = vrcp.pop %v590
    %v594 = vmul.f32 %v584, %v593
    %vm595 = vcmp.ge.s32.totalorder %v422, 32
    %vm596 = vcmp.lt.s32.totalorder %v422, 64
    %vm597 = vmand %vm595, %vm596
    %v598 = vsel %vm597, 1, 0
    %vm599 = vcmp.eq.s32.totalorder %v598, 1
    %v600 = vsel %vm599, %v315, 0.0
    %v601 = vsel %vm599, %v320, 0.0
    %v602 = vsel %vm599, %v413, 0.0
    %v603 = vsel %vm599, %v418, 0.0
    %604 = vmatprep.subr.mxu0 0.0
    %605 = vmatpush1.xpose.msra.mxu0 %v600
    %606 = vmatprep.subr.mxu0 0.0
    %607 = vmatpush1.xpose.msra.mxu0 0.0
    %608 = vmatprep.subr.mxu0 0.0
    %609 = vmatpush1.xpose.msra.mxu0 0.0
    %610 = vmatprep.subr.mxu0 0.0
    %611 = vmatpush1.xpose.msra.mxu0 0.0
    %612 = vmatprep.subr.mxu0 0.0
    %613 = vmatpush1.xpose.msra.mxu0 0.0
    %614 = vmatprep.subr.mxu0 0.0
    %615 = vmatpush1.xpose.msra.mxu0 0.0
    %616 = vmatprep.subr.mxu0 0.0
    %617 = vmatpush1.xpose.msra.mxu0 0.0
    %618 = vmatprep.subr.mxu0 0.0
    %619 = vmatpush1.xpose.msra.mxu0 0.0
    %620 = vmatprep.subr.mxu0 0.0
    %621 = vmatpush1.xpose.msra.mxu0 0.0
    %622 = vmatprep.subr.mxu0 0.0
    %623 = vmatpush1.xpose.msra.mxu0 0.0
    %624 = vmatprep.subr.mxu0 0.0
    %625 = vmatpush1.xpose.msra.mxu0 0.0
    %626 = vmatprep.subr.mxu0 0.0
    %627 = vmatpush1.xpose.msra.mxu0 0.0
    %628 = vmatprep.subr.mxu0 0.0
    %629 = vmatpush1.xpose.msra.mxu0 0.0
    %630 = vmatprep.subr.mxu0 0.0
    %631 = vmatpush1.xpose.msra.mxu0 0.0
    %632 = vmatprep.subr.mxu0 0.0
    %633 = vmatpush1.xpose.msra.mxu0 0.0
    %634 = vmatprep.subr.mxu0 0.0
    %635 = vmatpush1.xpose.msra.mxu0 0.0
    %636 = vmatprep.subr.mxu0 0.0
    %637 = vmatpush1.xpose.msra.mxu0 0.0
    %638 = vmatprep.subr.mxu0 0.0
    %639 = vmatpush1.xpose.msra.mxu0 0.0
    %640 = vmatprep.subr.mxu0 0.0
    %641 = vmatpush1.xpose.msra.mxu0 0.0
    %642 = vmatprep.subr.mxu0 0.0
    %643 = vmatpush1.xpose.msra.mxu0 0.0
    %644 = vmatprep.subr.mxu0 0.0
    %645 = vmatpush1.xpose.msra.mxu0 0.0
    %646 = vmatprep.subr.mxu0 0.0
    %647 = vmatpush1.xpose.msra.mxu0 0.0
    %648 = vmatprep.subr.mxu0 0.0
    %649 = vmatpush1.xpose.msra.mxu0 0.0
    %650 = vmatprep.subr.mxu0 0.0
    %651 = vmatpush1.xpose.msra.mxu0 0.0
    %652 = vmatprep.subr.mxu0 0.0
    %653 = vmatpush1.xpose.msra.mxu0 0.0
    %654 = vmatprep.subr.mxu0 0.0
    %655 = vmatpush1.xpose.msra.mxu0 0.0
    %656 = vmatprep.subr.mxu0 0.0
    %657 = vmatpush1.xpose.msra.mxu0 0.0
    %658 = vmatprep.subr.mxu0 0.0
    %659 = vmatpush1.xpose.msra.mxu0 0.0
    %660 = vmatprep.subr.mxu0 0.0
    %661 = vmatpush1.xpose.msra.mxu0 0.0
    %662 = vmatprep.subr.mxu0 0.0
    %663 = vmatpush1.xpose.msra.mxu0 0.0
    %664 = vmatprep.subr.mxu0 0.0
    %665 = vmatpush1.xpose.msra.mxu0 0.0
    %666 = vmatprep.subr.mxu0 0.0
    %667 = vmatpush1.xpose.msra.mxu0 0.0
    %668 = vmatprep.mubr.f32.mxu0 0.0
    %669 = vmatmul.mubr.f32.gmra.mrb[0].mxu0 %v217
    %v670 = vpop.f32.mrb[0].mxu0
    %v671 = vadd.f32 0.0, %v670
    %v672 = vpop.f32.mrb[0].mxu0
    %673 = vdwg.mxu0
    %674 = vmatprep.subr.mxu0 0.0
    %675 = vmatpush1.xpose.msra.mxu0 %v601
    %676 = vmatprep.subr.mxu0 0.0
    %677 = vmatpush1.xpose.msra.mxu0 0.0
    %678 = vmatprep.subr.mxu0 0.0
    %679 = vmatpush1.xpose.msra.mxu0 0.0
    %680 = vmatprep.subr.mxu0 0.0
    %681 = vmatpush1.xpose.msra.mxu0 0.0
    %682 = vmatprep.subr.mxu0 0.0
    %683 = vmatpush1.xpose.msra.mxu0 0.0
    %684 = vmatprep.subr.mxu0 0.0
    %685 = vmatpush1.xpose.msra.mxu0 0.0
    %686 = vmatprep.subr.mxu0 0.0
    %687 = vmatpush1.xpose.msra.mxu0 0.0
    %688 = vmatprep.subr.mxu0 0.0
    %689 = vmatpush1.xpose.msra.mxu0 0.0
    %690 = vmatprep.subr.mxu0 0.0
    %691 = vmatpush1.xpose.msra.mxu0 0.0
    %692 = vmatprep.subr.mxu0 0.0
    %693 = vmatpush1.xpose.msra.mxu0 0.0
    %694 = vmatprep.subr.mxu0 0.0
    %695 = vmatpush1.xpose.msra.mxu0 0.0
    %696 = vmatprep.subr.mxu0 0.0
    %697 = vmatpush1.xpose.msra.mxu0 0.0
    %698 = vmatprep.subr.mxu0 0.0
    %699 = vmatpush1.xpose.msra.mxu0 0.0
    %700 = vmatprep.subr.mxu0 0.0
    %701 = vmatpush1.xpose.msra.mxu0 0.0
    %702 = vmatprep.subr.mxu0 0.0
    %703 = vmatpush1.xpose.msra.mxu0 0.0
    %704 = vmatprep.subr.mxu0 0.0
    %705 = vmatpush1.xpose.msra.mxu0 0.0
    %706 = vmatprep.subr.mxu0 0.0
    %707 = vmatpush1.xpose.msra.mxu0 0.0
    %708 = vmatprep.subr.mxu0 0.0
    %709 = vmatpush1.xpose.msra.mxu0 0.0
    %710 = vmatprep.subr.mxu0 0.0
    %711 = vmatpush1.xpose.msra.mxu0 0.0
    %712 = vmatprep.subr.mxu0 0.0
    %713 = vmatpush1.xpose.msra.mxu0 0.0
    %714 = vmatprep.subr.mxu0 0.0
    %715 = vmatpush1.xpose.msra.mxu0 0.0
    %716 = vmatprep.subr.mxu0 0.0
    %717 = vmatpush1.xpose.msra.mxu0 0.0
    %718 = vmatprep.subr.mxu0 0.0
    %719 = vmatpush1.xpose.msra.mxu0 0.0
    %720 = vmatprep.subr.mxu0 0.0
    %721 = vmatpush1.xpose.msra.mxu0 0.0
    %722 = vmatprep.subr.mxu0 0.0
    %723 = vmatpush1.xpose.msra.mxu0 0.0
    %724 = vmatprep.subr.mxu0 0.0
    %725 = vmatpush1.xpose.msra.mxu0 0.0
    %726 = vmatprep.subr.mxu0 0.0
    %727 = vmatpush1.xpose.msra.mxu0 0.0
    %728 = vmatprep.subr.mxu0 0.0
    %729 = vmatpush1.xpose.msra.mxu0 0.0
    %730 = vmatprep.subr.mxu0 0.0
    %731 = vmatpush1.xpose.msra.mxu0 0.0
    %732 = vmatprep.subr.mxu0 0.0
    %733 = vmatpush1.xpose.msra.mxu0 0.0
    %734 = vmatprep.subr.mxu0 0.0
    %735 = vmatpush1.xpose.msra.mxu0 0.0
    %736 = vmatprep.subr.mxu0 0.0
    %737 = vmatpush1.xpose.msra.mxu0 0.0
    %738 = vmatprep.mubr.f32.mxu0 0.0
    %739 = vmatmul.mubr.f32.gmra.mrb[0].mxu0 %v222
    %v740 = vpop.f32.mrb[0].mxu0
    %v741 = vadd.f32 0.0, %v740
    %v742 = vpop.f32.mrb[0].mxu0
    %743 = vdwg.mxu0
    %v744 = vsel %vm572, %v671, -inf
    %745 = vmax.xlane.f32.xlu0 %v744
    %v746 = vpop.xlane.xlu0 %745
    %v747 = vsel %vm572, %v741, -inf
    %748 = vmax.xlane.f32.xlu0 %v747
    %v749 = vpop.xlane.xlu0 %748
    %v750 = vsub.f32 %v671, %v746
    %v751 = vsub.f32 %v741, %v749
    %v752 = vmul.f32 %v750, 1.442695
    %v753 = vpow.pop %v752
    %v754 = vmul.f32 %v751, 1.442695
    %v755 = vpow.pop %v754
    %v756 = vsel %vm572, %v753, 0.0
    %757 = vadd.xlane.f32.xlu0 %v756
    %v758 = vpop.xlane.xlu0 %757
    %v759 = vsel %vm572, %v755, 0.0
    %760 = vadd.xlane.f32.xlu0 %v759
    %v761 = vpop.xlane.xlu0 %760
    %v762 = vrcp.pop %v758
    %v763 = vmul.f32 %v753, %v762
    %v764 = vrcp.pop %v761
    %v765 = vmul.f32 %v755, %v764
    %v767 = vsel %vm572, %v763, 0
    %769 = vmatprep.subr.mxu0 0.0
    %770 = vmatpush1.msra.mxu0 %v602
    %771 = vmatprep.subr.mxu0 0.0
    %772 = vmatpush1.msra.mxu0 0.0
    %773 = vmatprep.subr.mxu0 0.0
    %774 = vmatpush1.msra.mxu0 0.0
    %775 = vmatprep.subr.mxu0 0.0
    %776 = vmatpush1.msra.mxu0 0.0
    %777 = vmatprep.subr.mxu0 0.0
    %778 = vmatpush1.msra.mxu0 0.0
    %779 = vmatprep.subr.mxu0 0.0
    %780 = vmatpush1.msra.mxu0 0.0
    %781 = vmatprep.subr.mxu0 0.0
    %782 = vmatpush1.msra.mxu0 0.0
    %783 = vmatprep.subr.mxu0 0.0
    %784 = vmatpush1.msra.mxu0 0.0
    %785 = vmatprep.subr.mxu0 0.0
    %786 = vmatpush1.msra.mxu0 0.0
    %787 = vmatprep.subr.mxu0 0.0
    %788 = vmatpush1.msra.mxu0 0.0
    %789 = vmatprep.subr.mxu0 0.0
    %790 = vmatpush1.msra.mxu0 0.0
    %791 = vmatprep.subr.mxu0 0.0
    %792 = vmatpush1.msra.mxu0 0.0
    %793 = vmatprep.subr.mxu0 0.0
    %794 = vmatpush1.msra.mxu0 0.0
    %795 = vmatprep.subr.mxu0 0.0
    %796 = vmatpush1.msra.mxu0 0.0
    %797 = vmatprep.subr.mxu0 0.0
    %798 = vmatpush1.msra.mxu0 0.0
    %799 = vmatprep.subr.mxu0 0.0
    %800 = vmatpush1.msra.mxu0 0.0
    %801 = vmatprep.subr.mxu0 0.0
    %802 = vmatpush1.msra.mxu0 0.0
    %803 = vmatprep.subr.mxu0 0.0
    %804 = vmatpush1.msra.mxu0 0.0
    %805 = vmatprep.subr.mxu0 0.0
    %806 = vmatpush1.msra.mxu0 0.0
    %807 = vmatprep.subr.mxu0 0.0
    %808 = vmatpush1.msra.mxu0 0.0
    %809 = vmatprep.subr.mxu0 0.0
    %810 = vmatpush1.msra.mxu0 0.0
    %811 = vmatprep.subr.mxu0 0.0
    %812 = vmatpush1.msra.mxu0 0.0
    %813 = vmatprep.subr.mxu0 0.0
    %814 = vmatpush1.msra.mxu0 0.0
    %815 = vmatprep.subr.mxu0 0.0
    %816 = vmatpush1.msra.mxu0 0.0
    %817 = vmatprep.subr.mxu0 0.0
    %818 = vmatpush1.msra.mxu0 0.0
    %819 = vmatprep.subr.mxu0 0.0
    %820 = vmatpush1.msra.mxu0 0.0
    %821 = vmatprep.subr.mxu0 0.0
    %822 = vmatpush1.msra.mxu0 0.0
    %823 = vmatprep.subr.mxu0 0.0
    %824 = vmatpush1.msra.mxu0 0.0
    %825 = vmatprep.subr.mxu0 0.0
    %826 = vmatpush1.msra.mxu0 0.0
    %827 = vmatprep.subr.mxu0 0.0
    %828 = vmatpush1.msra.mxu0 0.0
    %829 = vmatprep.subr.mxu0 0.0
    %830 = vmatpush1.msra.mxu0 0.0
    %831 = vmatprep.subr.mxu0 0.0
    %832 = vmatpush1.msra.mxu0 0.0
    %833 = vmatprep.mubr.f32.mxu0 0.0
    %834 = vmatmul.mubr.f32.gmra.mrb[0].mxu0 %v767
    %v835 = vpop.f32.mrb[0].mxu0
    %v836 = vadd.f32 0.0, %v835
    %v837 = vpop.f32.mrb[0].mxu0
    %838 = vdwg.mxu0
    %v840 = vsel %vm572, %v765, 0
    %842 = vmatprep.subr.mxu0 0.0
    %843 = vmatpush1.msra.mxu0 %v603
    %844 = vmatprep.subr.mxu0 0.0
    %845 = vmatpush1.msra.mxu0 0.0
    %846 = vmatprep.subr.mxu0 0.0
    %847 = vmatpush1.msra.mxu0 0.0
    %848 = vmatprep.subr.mxu0 0.0
    %849 = vmatpush1.msra.mxu0 0.0
    %850 = vmatprep.subr.mxu0 0.0
    %851 = vmatpush1.msra.mxu0 0.0
    %852 = vmatprep.subr.mxu0 0.0
    %853 = vmatpush1.msra.mxu0 0.0
    %854 = vmatprep.subr.mxu0 0.0
    %855 = vmatpush1.msra.mxu0 0.0
    %856 = vmatprep.subr.mxu0 0.0
    %857 = vmatpush1.msra.mxu0 0.0
    %858 = vmatprep.subr.mxu0 0.0
    %859 = vmatpush1.msra.mxu0 0.0
    %860 = vmatprep.subr.mxu0 0.0
    %861 = vmatpush1.msra.mxu0 0.0
    %862 = vmatprep.subr.mxu0 0.0
    %863 = vmatpush1.msra.mxu0 0.0
    %864 = vmatprep.subr.mxu0 0.0
    %865 = vmatpush1.msra.mxu0 0.0
    %866 = vmatprep.subr.mxu0 0.0
    %867 = vmatpush1.msra.mxu0 0.0
    %868 = vmatprep.subr.mxu0 0.0
    %869 = vmatpush1.msra.mxu0 0.0
    %870 = vmatprep.subr.mxu0 0.0
    %871 = vmatpush1.msra.mxu0 0.0
    %872 = vmatprep.subr.mxu0 0.0
    %873 = vmatpush1.msra.mxu0 0.0
    %874 = vmatprep.subr.mxu0 0.0
    %875 = vmatpush1.msra.mxu0 0.0
    %876 = vmatprep.subr.mxu0 0.0
    %877 = vmatpush1.msra.mxu0 0.0
    %878 = vmatprep.subr.mxu0 0.0
    %879 = vmatpush1.msra.mxu0 0.0
    %880 = vmatprep.subr.mxu0 0.0
    %881 = vmatpush1.msra.mxu0 0.0
    %882 = vmatprep.subr.mxu0 0.0
    %883 = vmatpush1.msra.mxu0 0.0
    %884 = vmatprep.subr.mxu0 0.0
    %885 = vmatpush1.msra.mxu0 0.0
    %886 = vmatprep.subr.mxu0 0.0
    %887 = vmatpush1.msra.mxu0 0.0
    %888 = vmatprep.subr.mxu0 0.0
    %889 = vmatpush1.msra.mxu0 0.0
    %890 = vmatprep.subr.mxu0 0.0
    %891 = vmatpush1.msra.mxu0 0.0
    %892 = vmatprep.subr.mxu0 0.0
    %893 = vmatpush1.msra.mxu0 0.0
    %894 = vmatprep.subr.mxu0 0.0
    %895 = vmatpush1.msra.mxu0 0.0
    %896 = vmatprep.subr.mxu0 0.0
    %897 = vmatpush1.msra.mxu0 0.0
    %898 = vmatprep.subr.mxu0 0.0
    %899 = vmatpush1.msra.mxu0 0.0
    %900 = vmatprep.subr.mxu0 0.0
    %901 = vmatpush1.msra.mxu0 0.0
    %902 = vmatprep.subr.mxu0 0.0
    %903 = vmatpush1.msra.mxu0 0.0
    %904 = vmatprep.subr.mxu0 0.0
    %905 = vmatpush1.msra.mxu0 0.0
    %906 = vmatprep.mubr.f32.mxu0 0.0
    %907 = vmatmul.mubr.f32.gmra.mrb[0].mxu0 %v840
    %v908 = vpop.f32.mrb[0].mxu0
    %v909 = vadd.f32 0.0, %v908
    %v910 = vpop.f32.mrb[0].mxu0
    %911 = vdwg.mxu0
    %v913 = vsel %vm572, %v592, 0
    %915 = vmatprep.subr.mxu0 0.0
    %916 = vmatpush1.msra.mxu0 %v430
    %917 = vmatprep.subr.mxu0 0.0
    %918 = vmatpush1.msra.mxu0 0.0
    %919 = vmatprep.subr.mxu0 0.0
    %920 = vmatpush1.msra.mxu0 0.0
    %921 = vmatprep.subr.mxu0 0.0
    %922 = vmatpush1.msra.mxu0 0.0
    %923 = vmatprep.subr.mxu0 0.0
    %924 = vmatpush1.msra.mxu0 0.0
    %925 = vmatprep.subr.mxu0 0.0
    %926 = vmatpush1.msra.mxu0 0.0
    %927 = vmatprep.subr.mxu0 0.0
    %928 = vmatpush1.msra.mxu0 0.0
    %929 = vmatprep.subr.mxu0 0.0
    %930 = vmatpush1.msra.mxu0 0.0
    %931 = vmatprep.subr.mxu0 0.0
    %932 = vmatpush1.msra.mxu0 0.0
    %933 = vmatprep.subr.mxu0 0.0
    %934 = vmatpush1.msra.mxu0 0.0
    %935 = vmatprep.subr.mxu0 0.0
    %936 = vmatpush1.msra.mxu0 0.0
    %937 = vmatprep.subr.mxu0 0.0
    %938 = vmatpush1.msra.mxu0 0.0
    %939 = vmatprep.subr.mxu0 0.0
    %940 = vmatpush1.msra.mxu0 0.0
    %941 = vmatprep.subr.mxu0 0.0
    %942 = vmatpush1.msra.mxu0 0.0
    %943 = vmatprep.subr.mxu0 0.0
    %944 = vmatpush1.msra.mxu0 0.0
    %945 = vmatprep.subr.mxu0 0.0
    %946 = vmatpush1.msra.mxu0 0.0
    %947 = vmatprep.subr.mxu0 0.0
    %948 = vmatpush1.msra.mxu0 0.0
    %949 = vmatprep.subr.mxu0 0.0
    %950 = vmatpush1.msra.mxu0 0.0
    %951 = vmatprep.subr.mxu0 0.0
    %952 = vmatpush1.msra.mxu0 0.0
    %953 = vmatprep.subr.mxu0 0.0
    %954 = vmatpush1.msra.mxu0 0.0
    %955 = vmatprep.subr.mxu0 0.0
    %956 = vmatpush1.msra.mxu0 0.0
    %957 = vmatprep.subr.mxu0 0.0
    %958 = vmatpush1.msra.mxu0 0.0
    %959 = vmatprep.subr.mxu0 0.0
    %960 = vmatpush1.msra.mxu0 0.0
    %961 = vmatprep.subr.mxu0 0.0
    %962 = vmatpush1.msra.mxu0 0.0
    %963 = vmatprep.subr.mxu0 0.0
    %964 = vmatpush1.msra.mxu0 0.0
    %965 = vmatprep.subr.mxu0 0.0
    %966 = vmatpush1.msra.mxu0 0.0
    %967 = vmatprep.subr.mxu0 0.0
    %968 = vmatpush1.msra.mxu0 0.0
    %969 = vmatprep.subr.mxu0 0.0
    %970 = vmatpush1.msra.mxu0 0.0
    %971 = vmatprep.subr.mxu0 0.0
    %972 = vmatpush1.msra.mxu0 0.0
    %973 = vmatprep.subr.mxu0 0.0
    %974 = vmatpush1.msra.mxu0 0.0
    %975 = vmatprep.subr.mxu0 0.0
    %976 = vmatpush1.msra.mxu0 0.0
    %977 = vmatprep.subr.mxu0 0.0
    %978 = vmatpush1.msra.mxu0 0.0
    %979 = vmatprep.mubr.f32.mxu0 0.0
    %980 = vmatmul.mubr.f32.gmra.mrb[0].mxu0 %v913
    %v981 = vpop.f32.mrb[0].mxu0
    %v982 = vadd.f32 %v836, %v981
    %v983 = vpop.f32.mrb[0].mxu0
    %984 = vdwg.mxu0
    %v986 = vsel %vm572, %v594, 0
    %988 = vmatprep.subr.mxu0 0.0
    %989 = vmatpush1.msra.mxu0 %v431
    %990 = vmatprep.subr.mxu0 0.0
    %991 = vmatpush1.msra.mxu0 0.0
    %992 = vmatprep.subr.mxu0 0.0
    %993 = vmatpush1.msra.mxu0 0.0
    %994 = vmatprep.subr.mxu0 0.0
    %995 = vmatpush1.msra.mxu0 0.0
    %996 = vmatprep.subr.mxu0 0.0
    %997 = vmatpush1.msra.mxu0 0.0
    %998 = vmatprep.subr.mxu0 0.0
    %999 = vmatpush1.msra.mxu0 0.0
    %1000 = vmatprep.subr.mxu0 0.0
    %1001 = vmatpush1.msra.mxu0 0.0
    %1002 = vmatprep.subr.mxu0 0.0
    %1003 = vmatpush1.msra.mxu0 0.0
    %1004 = vmatprep.subr.mxu0 0.0
    %1005 = vmatpush1.msra.mxu0 0.0
    %1006 = vmatprep.subr.mxu0 0.0
    %1007 = vmatpush1.msra.mxu0 0.0
    %1008 = vmatprep.subr.mxu0 0.0
    %1009 = vmatpush1.msra.mxu0 0.0
    %1010 = vmatprep.subr.mxu0 0.0
    %1011 = vmatpush1.msra.mxu0 0.0
    %1012 = vmatprep.subr.mxu0 0.0
    %1013 = vmatpush1.msra.mxu0 0.0
    %1014 = vmatprep.subr.mxu0 0.0
    %1015 = vmatpush1.msra.mxu0 0.0
    %1016 = vmatprep.subr.mxu0 0.0
    %1017 = vmatpush1.msra.mxu0 0.0
    %1018 = vmatprep.subr.mxu0 0.0
    %1019 = vmatpush1.msra.mxu0 0.0
    %1020 = vmatprep.subr.mxu0 0.0
    %1021 = vmatpush1.msra.mxu0 0.0
    %1022 = vmatprep.subr.mxu0 0.0
    %1023 = vmatpush1.msra.mxu0 0.0
    %1024 = vmatprep.subr.mxu0 0.0
    %1025 = vmatpush1.msra.mxu0 0.0
    %1026 = vmatprep.subr.mxu0 0.0
    %1027 = vmatpush1.msra.mxu0 0.0
    %1028 = vmatprep.subr.mxu0 0.0
    %1029 = vmatpush1.msra.mxu0 0.0
    %1030 = vmatprep.subr.mxu0 0.0
    %1031 = vmatpush1.msra.mxu0 0.0
    %1032 = vmatprep.subr.mxu0 0.0
    %1033 = vmatpush1.msra.mxu0 0.0
    %1034 = vmatprep.subr.mxu0 0.0
    %1035 = vmatpush1.msra.mxu0 0.0
    %1036 = vmatprep.subr.mxu0 0.0
    %1037 = vmatpush1.msra.mxu0 0.0
    %1038 = vmatprep.subr.mxu0 0.0
    %1039 = vmatpush1.msra.mxu0 0.0
    %1040 = vmatprep.subr.mxu0 0.0
    %1041 = vmatpush1.msra.mxu0 0.0
    %1042 = vmatprep.subr.mxu0 0.0
    %1043 = vmatpush1.msra.mxu0 0.0
    %1044 = vmatprep.subr.mxu0 0.0
    %1045 = vmatpush1.msra.mxu0 0.0
    %1046 = vmatprep.subr.mxu0 0.0
    %1047 = vmatpush1.msra.mxu0 0.0
    %1048 = vmatprep.subr.mxu0 0.0
    %1049 = vmatpush1.msra.mxu0 0.0
    %1050 = vmatprep.subr.mxu0 0.0
    %1051 = vmatpush1.msra.mxu0 0.0
    %1052 = vmatprep.mubr.f32.mxu0 0.0
    %1053 = vmatmul.mubr.f32.gmra.mrb[0].mxu0 %v986
    %v1054 = vpop.f32.mrb[0].mxu0
    %v1055 = vadd.f32 %v909, %v1054
    %v1056 = vpop.f32.mrb[0].mxu0
    %1057 = vdwg.mxu0
    %vm1058 = vcmp.ge.s32.totalorder %v422, 64
    %vm1059 = vcmp.lt.s32.totalorder %v422, 96
    %vm1060 = vmand %vm1058, %vm1059
    %v1061 = vsel %vm1060, 1, 0
    %vm1062 = vcmp.eq.s32.totalorder %v1061, 1
    %v1063 = vsel %vm1062, %v315, 0.0
    %v1064 = vsel %vm1062, %v320, 0.0
    %v1065 = vsel %vm1062, %v413, 0.0
    %v1066 = vsel %vm1062, %v418, 0.0
    %1067 = vmatprep.subr.mxu0 0.0
    %1068 = vmatpush1.xpose.msra.mxu0 %v1063
    %1069 = vmatprep.subr.mxu0 0.0
    %1070 = vmatpush1.xpose.msra.mxu0 0.0
    %1071 = vmatprep.subr.mxu0 0.0
    %1072 = vmatpush1.xpose.msra.mxu0 0.0
    %1073 = vmatprep.subr.mxu0 0.0
    %1074 = vmatpush1.xpose.msra.mxu0 0.0
    %1075 = vmatprep.subr.mxu0 0.0
    %1076 = vmatpush1.xpose.msra.mxu0 0.0
    %1077 = vmatprep.subr.mxu0 0.0
    %1078 = vmatpush1.xpose.msra.mxu0 0.0
    %1079 = vmatprep.subr.mxu0 0.0
    %1080 = vmatpush1.xpose.msra.mxu0 0.0
    %1081 = vmatprep.subr.mxu0 0.0
    %1082 = vmatpush1.xpose.msra.mxu0 0.0
    %1083 = vmatprep.subr.mxu0 0.0
    %1084 = vmatpush1.xpose.msra.mxu0 0.0
    %1085 = vmatprep.subr.mxu0 0.0
    %1086 = vmatpush1.xpose.msra.mxu0 0.0
    %1087 = vmatprep.subr.mxu0 0.0
    %1088 = vmatpush1.xpose.msra.mxu0 0.0
    %1089 = vmatprep.subr.mxu0 0.0
    %1090 = vmatpush1.xpose.msra.mxu0 0.0
    %1091 = vmatprep.subr.mxu0 0.0
    %1092 = vmatpush1.xpose.msra.mxu0 0.0
    %1093 = vmatprep.subr.mxu0 0.0
    %1094 = vmatpush1.xpose.msra.mxu0 0.0
    %1095 = vmatprep.subr.mxu0 0.0
    %1096 = vmatpush1.xpose.msra.mxu0 0.0
    %1097 = vmatprep.subr.mxu0 0.0
    %1098 = vmatpush1.xpose.msra.mxu0 0.0
    %1099 = vmatprep.subr.mxu0 0.0
    %1100 = vmatpush1.xpose.msra.mxu0 0.0
    %1101 = vmatprep.subr.mxu0 0.0
    %1102 = vmatpush1.xpose.msra.mxu0 0.0
    %1103 = vmatprep.subr.mxu0 0.0
    %1104 = vmatpush1.xpose.msra.mxu0 0.0
    %1105 = vmatprep.subr.mxu0 0.0
    %1106 = vmatpush1.xpose.msra.mxu0 0.0
    %1107 = vmatprep.subr.mxu0 0.0
    %1108 = vmatpush1.xpose.msra.mxu0 0.0
    %1109 = vmatprep.subr.mxu0 0.0
    %1110 = vmatpush1.xpose.msra.mxu0 0.0
    %1111 = vmatprep.subr.mxu0 0.0
    %1112 = vmatpush1.xpose.msra.mxu0 0.0
    %1113 = vmatprep.subr.mxu0 0.0
    %1114 = vmatpush1.xpose.msra.mxu0 0.0
    %1115 = vmatprep.subr.mxu0 0.0
    %1116 = vmatpush1.xpose.msra.mxu0 0.0
    %1117 = vmatprep.subr.mxu0 0.0
    %1118 = vmatpush1.xpose.msra.mxu0 0.0
    %1119 = vmatprep.subr.mxu0 0.0
    %1120 = vmatpush1.xpose.msra.mxu0 0.0
    %1121 = vmatprep.subr.mxu0 0.0
    %1122 = vmatpush1.xpose.msra.mxu0 0.0
    %1123 = vmatprep.subr.mxu0 0.0
    %1124 = vmatpush1.xpose.msra.mxu0 0.0
    %1125 = vmatprep.subr.mxu0 0.0
    %1126 = vmatpush1.xpose.msra.mxu0 0.0
    %1127 = vmatprep.subr.mxu0 0.0
    %1128 = vmatpush1.xpose.msra.mxu0 0.0
    %1129 = vmatprep.subr.mxu0 0.0
    %1130 = vmatpush1.xpose.msra.mxu0 0.0
    %1131 = vmatprep.mubr.f32.mxu0 0.0
    %1132 = vmatmul.mubr.f32.gmra.mrb[0].mxu0 %v217
    %v1133 = vpop.f32.mrb[0].mxu0
    %v1134 = vadd.f32 0.0, %v1133
    %v1135 = vpop.f32.mrb[0].mxu0
    %1136 = vdwg.mxu0
    %1137 = vmatprep.subr.mxu0 0.0
    %1138 = vmatpush1.xpose.msra.mxu0 %v1064
    %1139 = vmatprep.subr.mxu0 0.0
    %1140 = vmatpush1.xpose.msra.mxu0 0.0
    %1141 = vmatprep.subr.mxu0 0.0
    %1142 = vmatpush1.xpose.msra.mxu0 0.0
    %1143 = vmatprep.subr.mxu0 0.0
    %1144 = vmatpush1.xpose.msra.mxu0 0.0
    %1145 = vmatprep.subr.mxu0 0.0
    %1146 = vmatpush1.xpose.msra.mxu0 0.0
    %1147 = vmatprep.subr.mxu0 0.0
    %1148 = vmatpush1.xpose.msra.mxu0 0.0
    %1149 = vmatprep.subr.mxu0 0.0
    %1150 = vmatpush1.xpose.msra.mxu0 0.0
    %1151 = vmatprep.subr.mxu0 0.0
    %1152 = vmatpush1.xpose.msra.mxu0 0.0
    %1153 = vmatprep.subr.mxu0 0.0
    %1154 = vmatpush1.xpose.msra.mxu0 0.0
    %1155 = vmatprep.subr.mxu0 0.0
    %1156 = vmatpush1.xpose.msra.mxu0 0.0
    %1157 = vmatprep.subr.mxu0 0.0
    %1158 = vmatpush1.xpose.msra.mxu0 0.0
    %1159 = vmatprep.subr.mxu0 0.0
    %1160 = vmatpush1.xpose.msra.mxu0 0.0
    %1161 = vmatprep.subr.mxu0 0.0
    %1162 = vmatpush1.xpose.msra.mxu0 0.0
    %1163 = vmatprep.subr.mxu0 0.0
    %1164 = vmatpush1.xpose.msra.mxu0 0.0
    %1165 = vmatprep.subr.mxu0 0.0
    %1166 = vmatpush1.xpose.msra.mxu0 0.0
    %1167 = vmatprep.subr.mxu0 0.0
    %1168 = vmatpush1.xpose.msra.mxu0 0.0
    %1169 = vmatprep.subr.mxu0 0.0
    %1170 = vmatpush1.xpose.msra.mxu0 0.0
    %1171 = vmatprep.subr.mxu0 0.0
    %1172 = vmatpush1.xpose.msra.mxu0 0.0
    %1173 = vmatprep.subr.mxu0 0.0
    %1174 = vmatpush1.xpose.msra.mxu0 0.0
    %1175 = vmatprep.subr.mxu0 0.0
    %1176 = vmatpush1.xpose.msra.mxu0 0.0
    %1177 = vmatprep.subr.mxu0 0.0
    %1178 = vmatpush1.xpose.msra.mxu0 0.0
    %1179 = vmatprep.subr.mxu0 0.0
    %1180 = vmatpush1.xpose.msra.mxu0 0.0
    %1181 = vmatprep.subr.mxu0 0.0
    %1182 = vmatpush1.xpose.msra.mxu0 0.0
    %1183 = vmatprep.subr.mxu0 0.0
    %1184 = vmatpush1.xpose.msra.mxu0 0.0
    %1185 = vmatprep.subr.mxu0 0.0
    %1186 = vmatpush1.xpose.msra.mxu0 0.0
    %1187 = vmatprep.subr.mxu0 0.0
    %1188 = vmatpush1.xpose.msra.mxu0 0.0
    %1189 = vmatprep.subr.mxu0 0.0
    %1190 = vmatpush1.xpose.msra.mxu0 0.0
    %1191 = vmatprep.subr.mxu0 0.0
    %1192 = vmatpush1.xpose.msra.mxu0 0.0
    %1193 = vmatprep.subr.mxu0 0.0
    %1194 = vmatpush1.xpose.msra.mxu0 0.0
    %1195 = vmatprep.subr.mxu0 0.0
    %1196 = vmatpush1.xpose.msra.mxu0 0.0
    %1197 = vmatprep.subr.mxu0 0.0
    %1198 = vmatpush1.xpose.msra.mxu0 0.0
    %1199 = vmatprep.subr.mxu0 0.0
    %1200 = vmatpush1.xpose.msra.mxu0 0.0
    %1201 = vmatprep.mubr.f32.mxu0 0.0
    %1202 = vmatmul.mubr.f32.gmra.mrb[0].mxu0 %v222
    %v1203 = vpop.f32.mrb[0].mxu0
    %v1204 = vadd.f32 0.0, %v1203
    %v1205 = vpop.f32.mrb[0].mxu0
    %1206 = vdwg.mxu0
    %v1207 = vsel %vm572, %v1134, -inf
    %1208 = vmax.xlane.f32.xlu0 %v1207
    %v1209 = vpop.xlane.xlu0 %1208
    %v1210 = vsel %vm572, %v1204, -inf
    %1211 = vmax.xlane.f32.xlu0 %v1210
    %v1212 = vpop.xlane.xlu0 %1211
    %v1213 = vsub.f32 %v1134, %v1209
    %v1214 = vsub.f32 %v1204, %v1212
    %v1215 = vmul.f32 %v1213, 1.442695
    %v1216 = vpow.pop %v1215
    %v1217 = vmul.f32 %v1214, 1.442695
    %v1218 = vpow.pop %v1217
    %v1219 = vsel %vm572, %v1216, 0.0
    %1220 = vadd.xlane.f32.xlu0 %v1219
    %v1221 = vpop.xlane.xlu0 %1220
    %v1222 = vsel %vm572, %v1218, 0.0
    %1223 = vadd.xlane.f32.xlu0 %v1222
    %v1224 = vpop.xlane.xlu0 %1223
    %v1225 = vrcp.pop %v1221
    %v1226 = vmul.f32 %v1216, %v1225
    %v1227 = vrcp.pop %v1224
    %v1228 = vmul.f32 %v1218, %v1227
    %v1230 = vsel %vm572, %v1226, 0
    %1232 = vmatprep.subr.mxu0 0.0
    %1233 = vmatpush1.msra.mxu0 %v1065
    %1234 = vmatprep.subr.mxu0 0.0
    %1235 = vmatpush1.msra.mxu0 0.0
    %1236 = vmatprep.subr.mxu0 0.0
    %1237 = vmatpush1.msra.mxu0 0.0
    %1238 = vmatprep.subr.mxu0 0.0
    %1239 = vmatpush1.msra.mxu0 0.0
    %1240 = vmatprep.subr.mxu0 0.0
    %1241 = vmatpush1.msra.mxu0 0.0
    %1242 = vmatprep.subr.mxu0 0.0
    %1243 = vmatpush1.msra.mxu0 0.0
    %1244 = vmatprep.subr.mxu0 0.0
    %1245 = vmatpush1.msra.mxu0 0.0
    %1246 = vmatprep.subr.mxu0 0.0
    %1247 = vmatpush1.msra.mxu0 0.0
    %1248 = vmatprep.subr.mxu0 0.0
    %1249 = vmatpush1.msra.mxu0 0.0
    %1250 = vmatprep.subr.mxu0 0.0
    %1251 = vmatpush1.msra.mxu0 0.0
    %1252 = vmatprep.subr.mxu0 0.0
    %1253 = vmatpush1.msra.mxu0 0.0
    %1254 = vmatprep.subr.mxu0 0.0
    %1255 = vmatpush1.msra.mxu0 0.0
    %1256 = vmatprep.subr.mxu0 0.0
    %1257 = vmatpush1.msra.mxu0 0.0
    %1258 = vmatprep.subr.mxu0 0.0
    %1259 = vmatpush1.msra.mxu0 0.0
    %1260 = vmatprep.subr.mxu0 0.0
    %1261 = vmatpush1.msra.mxu0 0.0
    %1262 = vmatprep.subr.mxu0 0.0
    %1263 = vmatpush1.msra.mxu0 0.0
    %1264 = vmatprep.subr.mxu0 0.0
    %1265 = vmatpush1.msra.mxu0 0.0
    %1266 = vmatprep.subr.mxu0 0.0
    %1267 = vmatpush1.msra.mxu0 0.0
    %1268 = vmatprep.subr.mxu0 0.0
    %1269 = vmatpush1.msra.mxu0 0.0
    %1270 = vmatprep.subr.mxu0 0.0
    %1271 = vmatpush1.msra.mxu0 0.0
    %1272 = vmatprep.subr.mxu0 0.0
    %1273 = vmatpush1.msra.mxu0 0.0
    %1274 = vmatprep.subr.mxu0 0.0
    %1275 = vmatpush1.msra.mxu0 0.0
    %1276 = vmatprep.subr.mxu0 0.0
    %1277 = vmatpush1.msra.mxu0 0.0
    %1278 = vmatprep.subr.mxu0 0.0
    %1279 = vmatpush1.msra.mxu0 0.0
    %1280 = vmatprep.subr.mxu0 0.0
    %1281 = vmatpush1.msra.mxu0 0.0
    %1282 = vmatprep.subr.mxu0 0.0
    %1283 = vmatpush1.msra.mxu0 0.0
    %1284 = vmatprep.subr.mxu0 0.0
    %1285 = vmatpush1.msra.mxu0 0.0
    %1286 = vmatprep.subr.mxu0 0.0
    %1287 = vmatpush1.msra.mxu0 0.0
    %1288 = vmatprep.subr.mxu0 0.0
    %1289 = vmatpush1.msra.mxu0 0.0
    %1290 = vmatprep.subr.mxu0 0.0
    %1291 = vmatpush1.msra.mxu0 0.0
    %1292 = vmatprep.subr.mxu0 0.0
    %1293 = vmatpush1.msra.mxu0 0.0
    %1294 = vmatprep.subr.mxu0 0.0
    %1295 = vmatpush1.msra.mxu0 0.0
    %1296 = vmatprep.mubr.f32.mxu0 0.0
    %1297 = vmatmul.mubr.f32.gmra.mrb[0].mxu0 %v1230
    %v1298 = vpop.f32.mrb[0].mxu0
    %v1299 = vadd.f32 0.0, %v1298
    %v1300 = vpop.f32.mrb[0].mxu0
    %1301 = vdwg.mxu0
    %v1303 = vsel %vm572, %v1228, 0
    %1305 = vmatprep.subr.mxu0 0.0
    %1306 = vmatpush1.msra.mxu0 %v1066
    %1307 = vmatprep.subr.mxu0 0.0
    %1308 = vmatpush1.msra.mxu0 0.0
    %1309 = vmatprep.subr.mxu0 0.0
    %1310 = vmatpush1.msra.mxu0 0.0
    %1311 = vmatprep.subr.mxu0 0.0
    %1312 = vmatpush1.msra.mxu0 0.0
    %1313 = vmatprep.subr.mxu0 0.0
    %1314 = vmatpush1.msra.mxu0 0.0
    %1315 = vmatprep.subr.mxu0 0.0
    %1316 = vmatpush1.msra.mxu0 0.0
    %1317 = vmatprep.subr.mxu0 0.0
    %1318 = vmatpush1.msra.mxu0 0.0
    %1319 = vmatprep.subr.mxu0 0.0
    %1320 = vmatpush1.msra.mxu0 0.0
    %1321 = vmatprep.subr.mxu0 0.0
    %1322 = vmatpush1.msra.mxu0 0.0
    %1323 = vmatprep.subr.mxu0 0.0
    %1324 = vmatpush1.msra.mxu0 0.0
    %1325 = vmatprep.subr.mxu0 0.0
    %1326 = vmatpush1.msra.mxu0 0.0
    %1327 = vmatprep.subr.mxu0 0.0
    %1328 = vmatpush1.msra.mxu0 0.0
    %1329 = vmatprep.subr.mxu0 0.0
    %1330 = vmatpush1.msra.mxu0 0.0
    %1331 = vmatprep.subr.mxu0 0.0
    %1332 = vmatpush1.msra.mxu0 0.0
    %1333 = vmatprep.subr.mxu0 0.0
    %1334 = vmatpush1.msra.mxu0 0.0
    %1335 = vmatprep.subr.mxu0 0.0
    %1336 = vmatpush1.msra.mxu0 0.0
    %1337 = vmatprep.subr.mxu0 0.0
    %1338 = vmatpush1.msra.mxu0 0.0
    %1339 = vmatprep.subr.mxu0 0.0
    %1340 = vmatpush1.msra.mxu0 0.0
    %1341 = vmatprep.subr.mxu0 0.0
    %1342 = vmatpush1.msra.mxu0 0.0
    %1343 = vmatprep.subr.mxu0 0.0
    %1344 = vmatpush1.msra.mxu0 0.0
    %1345 = vmatprep.subr.mxu0 0.0
    %1346 = vmatpush1.msra.mxu0 0.0
    %1347 = vmatprep.subr.mxu0 0.0
    %1348 = vmatpush1.msra.mxu0 0.0
    %1349 = vmatprep.subr.mxu0 0.0
    %1350 = vmatpush1.msra.mxu0 0.0
    %1351 = vmatprep.subr.mxu0 0.0
    %1352 = vmatpush1.msra.mxu0 0.0
    %1353 = vmatprep.subr.mxu0 0.0
    %1354 = vmatpush1.msra.mxu0 0.0
    %1355 = vmatprep.subr.mxu0 0.0
    %1356 = vmatpush1.msra.mxu0 0.0
    %1357 = vmatprep.subr.mxu0 0.0
    %1358 = vmatpush1.msra.mxu0 0.0
    %1359 = vmatprep.subr.mxu0 0.0
    %1360 = vmatpush1.msra.mxu0 0.0
    %1361 = vmatprep.subr.mxu0 0.0
    %1362 = vmatpush1.msra.mxu0 0.0
    %1363 = vmatprep.subr.mxu0 0.0
    %1364 = vmatpush1.msra.mxu0 0.0
    %1365 = vmatprep.subr.mxu0 0.0
    %1366 = vmatpush1.msra.mxu0 0.0
    %1367 = vmatprep.subr.mxu0 0.0
    %1368 = vmatpush1.msra.mxu0 0.0
    %1369 = vmatprep.mubr.f32.mxu0 0.0
    %1370 = vmatmul.mubr.f32.gmra.mrb[0].mxu0 %v1303
    %v1371 = vpop.f32.mrb[0].mxu0
    %v1372 = vadd.f32 0.0, %v1371
    %v1373 = vpop.f32.mrb[0].mxu0
    %1374 = vdwg.mxu0
    %v1375 = vadd.f32 %v982, %v1299
    %v1376 = vadd.f32 %v1055, %v1372
    %vm1377 = vcmp.ge.s32.totalorder %v422, 96
    %vm1378 = vcmp.lt.s32.totalorder %v422, 128
    %vm1379 = vmand %vm1377, %vm1378
    %v1380 = vsel %vm1379, 1, 0
    %vm1381 = vcmp.eq.s32.totalorder %v1380, 1
    %v1382 = vsel %vm1381, %v315, 0.0
    %v1383 = vsel %vm1381, %v320, 0.0
    %v1384 = vsel %vm1381, %v413, 0.0
    %v1385 = vsel %vm1381, %v418, 0.0
    %1386 = vmatprep.subr.mxu0 0.0
    %1387 = vmatpush1.xpose.msra.mxu0 %v1382
    %1388 = vmatprep.subr.mxu0 0.0
    %1389 = vmatpush1.xpose.msra.mxu0 0.0
    %1390 = vmatprep.subr.mxu0 0.0
    %1391 = vmatpush1.xpose.msra.mxu0 0.0
    %1392 = vmatprep.subr.mxu0 0.0
    %1393 = vmatpush1.xpose.msra.mxu0 0.0
    %1394 = vmatprep.subr.mxu0 0.0
    %1395 = vmatpush1.xpose.msra.mxu0 0.0
    %1396 = vmatprep.subr.mxu0 0.0
    %1397 = vmatpush1.xpose.msra.mxu0 0.0
    %1398 = vmatprep.subr.mxu0 0.0
    %1399 = vmatpush1.xpose.msra.mxu0 0.0
    %1400 = vmatprep.subr.mxu0 0.0
    %1401 = vmatpush1.xpose.msra.mxu0 0.0
    %1402 = vmatprep.subr.mxu0 0.0
    %1403 = vmatpush1.xpose.msra.mxu0 0.0
    %1404 = vmatprep.subr.mxu0 0.0
    %1405 = vmatpush1.xpose.msra.mxu0 0.0
    %1406 = vmatprep.subr.mxu0 0.0
    %1407 = vmatpush1.xpose.msra.mxu0 0.0
    %1408 = vmatprep.subr.mxu0 0.0
    %1409 = vmatpush1.xpose.msra.mxu0 0.0
    %1410 = vmatprep.subr.mxu0 0.0
    %1411 = vmatpush1.xpose.msra.mxu0 0.0
    %1412 = vmatprep.subr.mxu0 0.0
    %1413 = vmatpush1.xpose.msra.mxu0 0.0
    %1414 = vmatprep.subr.mxu0 0.0
    %1415 = vmatpush1.xpose.msra.mxu0 0.0
    %1416 = vmatprep.subr.mxu0 0.0
    %1417 = vmatpush1.xpose.msra.mxu0 0.0
    %1418 = vmatprep.subr.mxu0 0.0
    %1419 = vmatpush1.xpose.msra.mxu0 0.0
    %1420 = vmatprep.subr.mxu0 0.0
    %1421 = vmatpush1.xpose.msra.mxu0 0.0
    %1422 = vmatprep.subr.mxu0 0.0
    %1423 = vmatpush1.xpose.msra.mxu0 0.0
    %1424 = vmatprep.subr.mxu0 0.0
    %1425 = vmatpush1.xpose.msra.mxu0 0.0
    %1426 = vmatprep.subr.mxu0 0.0
    %1427 = vmatpush1.xpose.msra.mxu0 0.0
    %1428 = vmatprep.subr.mxu0 0.0
    %1429 = vmatpush1.xpose.msra.mxu0 0.0
    %1430 = vmatprep.subr.mxu0 0.0
    %1431 = vmatpush1.xpose.msra.mxu0 0.0
    %1432 = vmatprep.subr.mxu0 0.0
    %1433 = vmatpush1.xpose.msra.mxu0 0.0
    %1434 = vmatprep.subr.mxu0 0.0
    %1435 = vmatpush1.xpose.msra.mxu0 0.0
    %1436 = vmatprep.subr.mxu0 0.0
    %1437 = vmatpush1.xpose.msra.mxu0 0.0
    %1438 = vmatprep.subr.mxu0 0.0
    %1439 = vmatpush1.xpose.msra.mxu0 0.0
    %1440 = vmatprep.subr.mxu0 0.0
    %1441 = vmatpush1.xpose.msra.mxu0 0.0
    %1442 = vmatprep.subr.mxu0 0.0
    %1443 = vmatpush1.xpose.msra.mxu0 0.0
    %1444 = vmatprep.subr.mxu0 0.0
    %1445 = vmatpush1.xpose.msra.mxu0 0.0
    %1446 = vmatprep.subr.mxu0 0.0
    %1447 = vmatpush1.xpose.msra.mxu0 0.0
    %1448 = vmatprep.subr.mxu0 0.0
    %1449 = vmatpush1.xpose.msra.mxu0 0.0
    %1450 = vmatprep.mubr.f32.mxu0 0.0
    %1451 = vmatmul.mubr.f32.gmra.mrb[0].mxu0 %v217
    %v1452 = vpop.f32.mrb[0].mxu0
    %v1453 = vadd.f32 0.0, %v1452
    %v1454 = vpop.f32.mrb[0].mxu0
    %1455 = vdwg.mxu0
    %1456 = vmatprep.subr.mxu0 0.0
    %1457 = vmatpush1.xpose.msra.mxu0 %v1383
    %1458 = vmatprep.subr.mxu0 0.0
    %1459 = vmatpush1.xpose.msra.mxu0 0.0
    %1460 = vmatprep.subr.mxu0 0.0
    %1461 = vmatpush1.xpose.msra.mxu0 0.0
    %1462 = vmatprep.subr.mxu0 0.0
    %1463 = vmatpush1.xpose.msra.mxu0 0.0
    %1464 = vmatprep.subr.mxu0 0.0
    %1465 = vmatpush1.xpose.msra.mxu0 0.0
    %1466 = vmatprep.subr.mxu0 0.0
    %1467 = vmatpush1.xpose.msra.mxu0 0.0
    %1468 = vmatprep.subr.mxu0 0.0
    %1469 = vmatpush1.xpose.msra.mxu0 0.0
    %1470 = vmatprep.subr.mxu0 0.0
    %1471 = vmatpush1.xpose.msra.mxu0 0.0
    %1472 = vmatprep.subr.mxu0 0.0
    %1473 = vmatpush1.xpose.msra.mxu0 0.0
    %1474 = vmatprep.subr.mxu0 0.0
    %1475 = vmatpush1.xpose.msra.mxu0 0.0
    %1476 = vmatprep.subr.mxu0 0.0
    %1477 = vmatpush1.xpose.msra.mxu0 0.0
    %1478 = vmatprep.subr.mxu0 0.0
    %1479 = vmatpush1.xpose.msra.mxu0 0.0
    %1480 = vmatprep.subr.mxu0 0.0
    %1481 = vmatpush1.xpose.msra.mxu0 0.0
    %1482 = vmatprep.subr.mxu0 0.0
    %1483 = vmatpush1.xpose.msra.mxu0 0.0
    %1484 = vmatprep.subr.mxu0 0.0
    %1485 = vmatpush1.xpose.msra.mxu0 0.0
    %1486 = vmatprep.subr.mxu0 0.0
    %1487 = vmatpush1.xpose.msra.mxu0 0.0
    %1488 = vmatprep.subr.mxu0 0.0
    %1489 = vmatpush1.xpose.msra.mxu0 0.0
    %1490 = vmatprep.subr.mxu0 0.0
    %1491 = vmatpush1.xpose.msra.mxu0 0.0
    %1492 = vmatprep.subr.mxu0 0.0
    %1493 = vmatpush1.xpose.msra.mxu0 0.0
    %1494 = vmatprep.subr.mxu0 0.0
    %1495 = vmatpush1.xpose.msra.mxu0 0.0
    %1496 = vmatprep.subr.mxu0 0.0
    %1497 = vmatpush1.xpose.msra.mxu0 0.0
    %1498 = vmatprep.subr.mxu0 0.0
    %1499 = vmatpush1.xpose.msra.mxu0 0.0
    %1500 = vmatprep.subr.mxu0 0.0
    %1501 = vmatpush1.xpose.msra.mxu0 0.0
    %1502 = vmatprep.subr.mxu0 0.0
    %1503 = vmatpush1.xpose.msra.mxu0 0.0
    %1504 = vmatprep.subr.mxu0 0.0
    %1505 = vmatpush1.xpose.msra.mxu0 0.0
    %1506 = vmatprep.subr.mxu0 0.0
    %1507 = vmatpush1.xpose.msra.mxu0 0.0
    %1508 = vmatprep.subr.mxu0 0.0
    %1509 = vmatpush1.xpose.msra.mxu0 0.0
    %1510 = vmatprep.subr.mxu0 0.0
    %1511 = vmatpush1.xpose.msra.mxu0 0.0
    %1512 = vmatprep.subr.mxu0 0.0
    %1513 = vmatpush1.xpose.msra.mxu0 0.0
    %1514 = vmatprep.subr.mxu0 0.0
    %1515 = vmatpush1.xpose.msra.mxu0 0.0
    %1516 = vmatprep.subr.mxu0 0.0
    %1517 = vmatpush1.xpose.msra.mxu0 0.0
    %1518 = vmatprep.subr.mxu0 0.0
    %1519 = vmatpush1.xpose.msra.mxu0 0.0
    %1520 = vmatprep.mubr.f32.mxu0 0.0
    %1521 = vmatmul.mubr.f32.gmra.mrb[0].mxu0 %v222
    %v1522 = vpop.f32.mrb[0].mxu0
    %v1523 = vadd.f32 0.0, %v1522
    %v1524 = vpop.f32.mrb[0].mxu0
    %1525 = vdwg.mxu0
    %v1526 = vsel %vm572, %v1453, -inf
    %1527 = vmax.xlane.f32.xlu0 %v1526
    %v1528 = vpop.xlane.xlu0 %1527
    %v1529 = vsel %vm572, %v1523, -inf
    %1530 = vmax.xlane.f32.xlu0 %v1529
    %v1531 = vpop.xlane.xlu0 %1530
    %v1532 = vsub.f32 %v1453, %v1528
    %v1533 = vsub.f32 %v1523, %v1531
    %v1534 = vmul.f32 %v1532, 1.442695
    %v1535 = vpow.pop %v1534
    %v1536 = vmul.f32 %v1533, 1.442695
    %v1537 = vpow.pop %v1536
    %v1538 = vsel %vm572, %v1535, 0.0
    %1539 = vadd.xlane.f32.xlu0 %v1538
    %v1540 = vpop.xlane.xlu0 %1539
    %v1541 = vsel %vm572, %v1537, 0.0
    %1542 = vadd.xlane.f32.xlu0 %v1541
    %v1543 = vpop.xlane.xlu0 %1542
    %v1544 = vrcp.pop %v1540
    %v1545 = vmul.f32 %v1535, %v1544
    %v1546 = vrcp.pop %v1543
    %v1547 = vmul.f32 %v1537, %v1546
    %v1549 = vsel %vm572, %v1545, 0
    %1551 = vmatprep.subr.mxu0 0.0
    %1552 = vmatpush1.msra.mxu0 %v1384
    %1553 = vmatprep.subr.mxu0 0.0
    %1554 = vmatpush1.msra.mxu0 0.0
    %1555 = vmatprep.subr.mxu0 0.0
    %1556 = vmatpush1.msra.mxu0 0.0
    %1557 = vmatprep.subr.mxu0 0.0
    %1558 = vmatpush1.msra.mxu0 0.0
    %1559 = vmatprep.subr.mxu0 0.0
    %1560 = vmatpush1.msra.mxu0 0.0
    %1561 = vmatprep.subr.mxu0 0.0
    %1562 = vmatpush1.msra.mxu0 0.0
    %1563 = vmatprep.subr.mxu0 0.0
    %1564 = vmatpush1.msra.mxu0 0.0
    %1565 = vmatprep.subr.mxu0 0.0
    %1566 = vmatpush1.msra.mxu0 0.0
    %1567 = vmatprep.subr.mxu0 0.0
    %1568 = vmatpush1.msra.mxu0 0.0
    %1569 = vmatprep.subr.mxu0 0.0
    %1570 = vmatpush1.msra.mxu0 0.0
    %1571 = vmatprep.subr.mxu0 0.0
    %1572 = vmatpush1.msra.mxu0 0.0
    %1573 = vmatprep.subr.mxu0 0.0
    %1574 = vmatpush1.msra.mxu0 0.0
    %1575 = vmatprep.subr.mxu0 0.0
    %1576 = vmatpush1.msra.mxu0 0.0
    %1577 = vmatprep.subr.mxu0 0.0
    %1578 = vmatpush1.msra.mxu0 0.0
    %1579 = vmatprep.subr.mxu0 0.0
    %1580 = vmatpush1.msra.mxu0 0.0
    %1581 = vmatprep.subr.mxu0 0.0
    %1582 = vmatpush1.msra.mxu0 0.0
    %1583 = vmatprep.subr.mxu0 0.0
    %1584 = vmatpush1.msra.mxu0 0.0
    %1585 = vmatprep.subr.mxu0 0.0
    %1586 = vmatpush1.msra.mxu0 0.0
    %1587 = vmatprep.subr.mxu0 0.0
    %1588 = vmatpush1.msra.mxu0 0.0
    %1589 = vmatprep.subr.mxu0 0.0
    %1590 = vmatpush1.msra.mxu0 0.0
    %1591 = vmatprep.subr.mxu0 0.0
    %1592 = vmatpush1.msra.mxu0 0.0
    %1593 = vmatprep.subr.mxu0 0.0
    %1594 = vmatpush1.msra.mxu0 0.0
    %1595 = vmatprep.subr.mxu0 0.0
    %1596 = vmatpush1.msra.mxu0 0.0
    %1597 = vmatprep.subr.mxu0 0.0
    %1598 = vmatpush1.msra.mxu0 0.0
    %1599 = vmatprep.subr.mxu0 0.0
    %1600 = vmatpush1.msra.mxu0 0.0
    %1601 = vmatprep.subr.mxu0 0.0
    %1602 = vmatpush1.msra.mxu0 0.0
    %1603 = vmatprep.subr.mxu0 0.0
    %1604 = vmatpush1.msra.mxu0 0.0
    %1605 = vmatprep.subr.mxu0 0.0
    %1606 = vmatpush1.msra.mxu0 0.0
    %1607 = vmatprep.subr.mxu0 0.0
    %1608 = vmatpush1.msra.mxu0 0.0
    %1609 = vmatprep.subr.mxu0 0.0
    %1610 = vmatpush1.msra.mxu0 0.0
    %1611 = vmatprep.subr.mxu0 0.0
    %1612 = vmatpush1.msra.mxu0 0.0
    %1613 = vmatprep.subr.mxu0 0.0
    %1614 = vmatpush1.msra.mxu0 0.0
    %1615 = vmatprep.mubr.f32.mxu0 0.0
    %1616 = vmatmul.mubr.f32.gmra.mrb[0].mxu0 %v1549
    %v1617 = vpop.f32.mrb[0].mxu0
    %v1618 = vadd.f32 0.0, %v1617
    %v1619 = vpop.f32.mrb[0].mxu0
    %1620 = vdwg.mxu0
    %v1622 = vsel %vm572, %v1547, 0
    %1624 = vmatprep.subr.mxu0 0.0
    %1625 = vmatpush1.msra.mxu0 %v1385
    %1626 = vmatprep.subr.mxu0 0.0
    %1627 = vmatpush1.msra.mxu0 0.0
    %1628 = vmatprep.subr.mxu0 0.0
    %1629 = vmatpush1.msra.mxu0 0.0
    %1630 = vmatprep.subr.mxu0 0.0
    %1631 = vmatpush1.msra.mxu0 0.0
    %1632 = vmatprep.subr.mxu0 0.0
    %1633 = vmatpush1.msra.mxu0 0.0
    %1634 = vmatprep.subr.mxu0 0.0
    %1635 = vmatpush1.msra.mxu0 0.0
    %1636 = vmatprep.subr.mxu0 0.0
    %1637 = vmatpush1.msra.mxu0 0.0
    %1638 = vmatprep.subr.mxu0 0.0
    %1639 = vmatpush1.msra.mxu0 0.0
    %1640 = vmatprep.subr.mxu0 0.0
    %1641 = vmatpush1.msra.mxu0 0.0
    %1642 = vmatprep.subr.mxu0 0.0
    %1643 = vmatpush1.msra.mxu0 0.0
    %1644 = vmatprep.subr.mxu0 0.0
    %1645 = vmatpush1.msra.mxu0 0.0
    %1646 = vmatprep.subr.mxu0 0.0
    %1647 = vmatpush1.msra.mxu0 0.0
    %1648 = vmatprep.subr.mxu0 0.0
    %1649 = vmatpush1.msra.mxu0 0.0
    %1650 = vmatprep.subr.mxu0 0.0
    %1651 = vmatpush1.msra.mxu0 0.0
    %1652 = vmatprep.subr.mxu0 0.0
    %1653 = vmatpush1.msra.mxu0 0.0
    %1654 = vmatprep.subr.mxu0 0.0
    %1655 = vmatpush1.msra.mxu0 0.0
    %1656 = vmatprep.subr.mxu0 0.0
    %1657 = vmatpush1.msra.mxu0 0.0
    %1658 = vmatprep.subr.mxu0 0.0
    %1659 = vmatpush1.msra.mxu0 0.0
    %1660 = vmatprep.subr.mxu0 0.0
    %1661 = vmatpush1.msra.mxu0 0.0
    %1662 = vmatprep.subr.mxu0 0.0
    %1663 = vmatpush1.msra.mxu0 0.0
    %1664 = vmatprep.subr.mxu0 0.0
    %1665 = vmatpush1.msra.mxu0 0.0
    %1666 = vmatprep.subr.mxu0 0.0
    %1667 = vmatpush1.msra.mxu0 0.0
    %1668 = vmatprep.subr.mxu0 0.0
    %1669 = vmatpush1.msra.mxu0 0.0
    %1670 = vmatprep.subr.mxu0 0.0
    %1671 = vmatpush1.msra.mxu0 0.0
    %1672 = vmatprep.subr.mxu0 0.0
    %1673 = vmatpush1.msra.mxu0 0.0
    %1674 = vmatprep.subr.mxu0 0.0
    %1675 = vmatpush1.msra.mxu0 0.0
    %1676 = vmatprep.subr.mxu0 0.0
    %1677 = vmatpush1.msra.mxu0 0.0
    %1678 = vmatprep.subr.mxu0 0.0
    %1679 = vmatpush1.msra.mxu0 0.0
    %1680 = vmatprep.subr.mxu0 0.0
    %1681 = vmatpush1.msra.mxu0 0.0
    %1682 = vmatprep.subr.mxu0 0.0
    %1683 = vmatpush1.msra.mxu0 0.0
    %1684 = vmatprep.subr.mxu0 0.0
    %1685 = vmatpush1.msra.mxu0 0.0
    %1686 = vmatprep.subr.mxu0 0.0
    %1687 = vmatpush1.msra.mxu0 0.0
    %1688 = vmatprep.mubr.f32.mxu0 0.0
    %1689 = vmatmul.mubr.f32.gmra.mrb[0].mxu0 %v1622
    %v1690 = vpop.f32.mrb[0].mxu0
    %v1691 = vadd.f32 0.0, %v1690
    %v1692 = vpop.f32.mrb[0].mxu0
    %1693 = vdwg.mxu0
    %v1694 = vadd.f32 %v1375, %v1618
    %v1695 = vadd.f32 %v1376, %v1691
    %v1696 = vld [vmem:[#allocation11] sm:$0xff]
    %v1697 = vld [vmem:[#allocation11 + $0x8] sm:$0xff]
    %v1698 = vld [vmem:[#allocation11 + $0x10] sm:$0xff]
    %v1699 = vld [vmem:[#allocation11 + $0x18] sm:$0xff]
    %v1700 = vld [vmem:[#allocation11 + $0x20] sm:$0xff]
    %v1701 = vld [vmem:[#allocation11 + $0x28] sm:$0xff]
    %v1702 = vld [vmem:[#allocation11 + $0x30] sm:$0xff]
    %v1703 = vld [vmem:[#allocation11 + $0x38] sm:$0xff]
    %v1704 = vld [vmem:[#allocation11 + $0x40] sm:$0xff]
    %v1705 = vld [vmem:[#allocation11 + $0x48] sm:$0xff]
    %v1706 = vld [vmem:[#allocation11 + $0x50] sm:$0xff]
    %v1707 = vld [vmem:[#allocation11 + $0x58] sm:$0xff]
    %v1708 = vld [vmem:[#allocation11 + $0x60] sm:$0xff]
    %v1709 = vld [vmem:[#allocation11 + $0x68] sm:$0xff]
    %v1710 = vld [vmem:[#allocation11 + $0x70] sm:$0xff]
    %v1711 = vld [vmem:[#allocation11 + $0x78] sm:$0xff]
    %v1712 = vld [vmem:[%s10] sm:$0x1]
    %v1714 = vlaneseq
    %v1715 = vshrl.u32 %v1714, 7
    %v1716 = vsub.s32 0, %v1715
    %v1717 = vrot.slane %v1712, %v1716
    %1719 = vmatprep.subr.mxu0 0.0
    %1720 = vmatpush1.msra.mxu0 %v1696
    %1721 = vmatprep.subr.mxu0 0.0
    %1722 = vmatpush1.msra.mxu0 %v1697
    %1723 = vmatprep.subr.mxu0 0.0
    %1724 = vmatpush1.msra.mxu0 %v1698
    %1725 = vmatprep.subr.mxu0 0.0
    %1726 = vmatpush1.msra.mxu0 %v1699
    %1727 = vmatprep.subr.mxu0 0.0
    %1728 = vmatpush1.msra.mxu0 %v1700
    %1729 = vmatprep.subr.mxu0 0.0
    %1730 = vmatpush1.msra.mxu0 %v1701
    %1731 = vmatprep.subr.mxu0 0.0
    %1732 = vmatpush1.msra.mxu0 %v1702
    %1733 = vmatprep.subr.mxu0 0.0
    %1734 = vmatpush1.msra.mxu0 %v1703
    %1735 = vmatprep.subr.mxu0 0.0
    %1736 = vmatpush1.msra.mxu0 %v1704
    %1737 = vmatprep.subr.mxu0 0.0
    %1738 = vmatpush1.msra.mxu0 %v1705
    %1739 = vmatprep.subr.mxu0 0.0
    %1740 = vmatpush1.msra.mxu0 %v1706
    %1741 = vmatprep.subr.mxu0 0.0
    %1742 = vmatpush1.msra.mxu0 %v1707
    %1743 = vmatprep.subr.mxu0 0.0
    %1744 = vmatpush1.msra.mxu0 %v1708
    %1745 = vmatprep.subr.mxu0 0.0
    %1746 = vmatpush1.msra.mxu0 %v1709
    %1747 = vmatprep.subr.mxu0 0.0
    %1748 = vmatpush1.msra.mxu0 %v1710
    %1749 = vmatprep.subr.mxu0 0.0
    %1750 = vmatpush1.msra.mxu0 %v1711
    %1751 = vmatprep.subr.mxu0 0.0
    %1752 = vmatpush1.msra.mxu0 0.0
    %1753 = vmatprep.subr.mxu0 0.0
    %1754 = vmatpush1.msra.mxu0 0.0
    %1755 = vmatprep.subr.mxu0 0.0
    %1756 = vmatpush1.msra.mxu0 0.0
    %1757 = vmatprep.subr.mxu0 0.0
    %1758 = vmatpush1.msra.mxu0 0.0
    %1759 = vmatprep.subr.mxu0 0.0
    %1760 = vmatpush1.msra.mxu0 0.0
    %1761 = vmatprep.subr.mxu0 0.0
    %1762 = vmatpush1.msra.mxu0 0.0
    %1763 = vmatprep.subr.mxu0 0.0
    %1764 = vmatpush1.msra.mxu0 0.0
    %1765 = vmatprep.subr.mxu0 0.0
    %1766 = vmatpush1.msra.mxu0 0.0
    %1767 = vmatprep.subr.mxu0 0.0
    %1768 = vmatpush1.msra.mxu0 0.0
    %1769 = vmatprep.subr.mxu0 0.0
    %1770 = vmatpush1.msra.mxu0 0.0
    %1771 = vmatprep.subr.mxu0 0.0
    %1772 = vmatpush1.msra.mxu0 0.0
    %1773 = vmatprep.subr.mxu0 0.0
    %1774 = vmatpush1.msra.mxu0 0.0
    %1775 = vmatprep.subr.mxu0 0.0
    %1776 = vmatpush1.msra.mxu0 0.0
    %1777 = vmatprep.subr.mxu0 0.0
    %1778 = vmatpush1.msra.mxu0 0.0
    %1779 = vmatprep.subr.mxu0 0.0
    %1780 = vmatpush1.msra.mxu0 0.0
    %1781 = vmatprep.subr.mxu0 0.0
    %1782 = vmatpush1.msra.mxu0 0.0
    %1783 = vmatprep.mubr.f32.mxu0 0.0
    %1784 = vmatmul.mubr.f32.gmra.mrb[0].mxu0 %v1694
    %v1785 = vpop.f32.mrb[0].mxu0
    %v1786 = vadd.f32 %v1717, %v1785
    %v1787 = vpop.f32.mrb[0].mxu0
    %1788 = vmatprep.mubr.f32.mxu0 0.0
    %1789 = vmatmul.mubr.f32.gmra.mrb[0].mxu0 %v1695
    %v1790 = vpop.f32.mrb[0].mxu0
    %v1791 = vadd.f32 %v1717, %v1790
    %v1792 = vpop.f32.mrb[0].mxu0
    %1793 = vdwg.mxu0
    %1794 = vst [vmem:[#allocation13] sm:$0xff] %v1786
    %1795 = vst [vmem:[#allocation13 + $0x8] sm:$0xff] %v1791
    // Predicated region
    $region70: #{multi_head_attention.1} parent=1 // pred_check
      _
    $region71: #{multi_head_attention.1} parent=1 // pred_check_branch
      %1797 = sbr.rel (0) target = $region73
    $region72: #{multi_head_attention.1} parent=1 // pred_region
      %s1799 = ssub.s32 256, 256
      %1800 = vsyncadd [#allocation4], %s1799
      %s1801 = sshll.u32 [#allocation13], 4
      %s1802 = int_to_ptr.vmem [resolvable:$true] %s1801
      %1807 = dma.vmem_to_hbm [thread:$0]  %s1802, 256, %s11, [#allocation4], 128, 128, 8
    $region73: #{multi_head_attention.1} parent=1 // pred_fallthru
      _
    // Predicated region
    $region74: #{multi_head_attention.1} parent=1 // pred_check
      _
    $region75: #{multi_head_attention.1} parent=1 // pred_check_branch
      %1809 = sbr.rel (0) target = $region77
    $region76: #{multi_head_attention.1} parent=1 // pred_region
      %1810 = dma.done [#allocation4], 256
    $region77: #{multi_head_attention.1} parent=1 // pred_fallthru
      _
    %1811 = vsyncpa [#allocation3], 1
    %1812 = vsyncpa [#allocation6], 1
    %1813 = vsyncpa [#allocation9], 1
    %1814 = vsyncpa [#allocation12], 1
    %1815 = vsyncpa [#allocation4], 1

</llo_original>
